<compile_context>
chip_gen: v7x
topology: tpu7x:2x2x1
jax: 0.10.0
libtpu: 0.0.40
codegen_flags: <defaults>
</compile_context>

<pallas_src>
import functools

import jax
import jax.numpy as jnp
import numpy as np
from jax.experimental import pallas as pl
from jax.experimental.pallas import tpu as pltpu

# Off-center depthwise tap offsets; the wrapper builds the masks in exactly this order.
_OFFSETS = tuple((dy, dx) for dy in (-1, 0, 1) for dx in (-1, 0, 1) if (dy, dx) != (0, 0))

# Column layout of the packed per-channel constant slab (hidden, 16):
#   cols 0..8 : depthwise 3x3 taps (BN2 scale pre-folded), k = (dy+1)*3 + (dx+1)
#   col 9     : BN1 folded bias b1
#   col 10    : BN2 folded bias b2
#   col 11    : BN3 folded bias b3 (rows 0..Cout-1 valid)
_NCOL = 16


def _inverted_residual_kernel(
    x_ref,      # (Bblk, Cin, HW)   input, channels on sublane, H*W on lanes
    w1_ref,     # (hidden, Cin)     expand 1x1 weight, BN1 scale folded
    w2_ref,     # (Cout, hidden)    project 1x1 weight, BN3 scale folded
    c_ref,      # (hidden, 16)      packed per-channel constants (taps + biases)
    mask_ref,   # (8, HW)           f32 0/1 edge-validity masks, host precomputed
    o_ref,      # (Bblk, Cout, HW)
    *, Bblk, Cout, H, W,
):
    HW = H * W

    # Weights + per-channel constants: loaded once, resident for the whole batch block.
    w1 = w1_ref[...]                                      # (hidden, Cin)
    w2 = w2_ref[...]                                      # (Cout, hidden)
    taps = [c_ref[:, k:k + 1] for k in range(9)]          # each (hidden, 1)
    b1 = c_ref[:, 9:10]                                   # (hidden, 1)
    b2 = c_ref[:, 10:11]                                  # (hidden, 1)
    b3 = c_ref[0:Cout, 11:12]                             # (Cout, 1)
    masks = [mask_ref[m:m + 1, :] for m in range(8)]      # each (1, HW), batch-invariant

    # Statically unrolled over the batch block: one basic block, so the LLO scheduler can
    # overlap the MXU matmuls of image b+1 with the VPU depthwise chain of image b.
    for b in range(Bblk):
        x = x_ref[b]                                      # (Cin, HW)

        # ---- 1x1 expand conv (BN1 scale folded into w1) + bias + ReLU6 ----
        h = jnp.dot(w1, x, preferred_element_type=jnp.float32)      # (hidden, HW)
        h = jnp.clip(h + b1, 0.0, 6.0)

        # ---- 3x3 depthwise conv, stride=1, pad=1 (BN2 scale folded into taps) ----
        # Flattened spatial index p = y*W + w lives on the lane axis; a (dy,dx) tap reads
        # h[:, p + dy*W + dx], realized as an XLU lane rotation + precomputed edge mask.
        acc = h * taps[4]                                 # center tap (dy=0, dx=0)
        for m, (dy, dx) in enumerate(_OFFSETS):
            k = (dy + 1) * 3 + (dx + 1)
            shift = (-(dy * W + dx)) % HW                 # result[p] = h[p + dy*W + dx]
            shifted = pltpu.roll(h, shift, axis=1)
            acc = acc + (shifted * masks[m]) * taps[k]
        y = jnp.clip(acc + b2, 0.0, 6.0)                  # BN2 bias + ReLU6

        # ---- 1x1 project conv (BN3 scale folded into w2) + bias + identity shortcut ----
        o = jnp.dot(w2, y, preferred_element_type=jnp.float32)      # (Cout, HW)
        o_ref[b] = (o + b3 + x).astype(o_ref.dtype)       # residual (Cin == Cout)


def inverted_residual_pallas(x_nchw, params):
    """x_nchw: (B, Cin, H, W) float32. Returns (B, Cout, H, W)."""
    (w1, s1, b1, wdw, s2, b2, w2, s3, b3) = params
    B, Cin, H, W = x_nchw.shape
    hidden = w1.shape[0]
    Cout = w2.shape[0]
    assert Cin == Cout, "identity shortcut requires in_channels == out_channels (stride=1)"
    HW = H * W
    assert HW % 128 == 0, "lane-dense layout expects H*W to be a multiple of 128"

    # Free reshape only -- no HBM transposes.
    x = x_nchw.reshape(B, Cin, HW)

    # ---- Host-side one-shot prep ----
    # Fold BN scales into the conv weights (inference-mode BN).
    w1f = (w1 * s1[:, None]).astype(jnp.float32)                    # (hidden, Cin)
    w2f = (w2 * s3[:, None]).astype(jnp.float32)                    # (Cout, hidden)
    taps = (wdw * s2[:, None, None]).reshape(hidden, 9)             # k = ky*3 + kx

    # Pack all per-channel vectors into one lane-padded slab.
    cslab = jnp.zeros((hidden, _NCOL), jnp.float32)
    cslab = cslab.at[:, 0:9].set(taps)
    cslab = cslab.at[:, 9].set(b1)
    cslab = cslab.at[:, 10].set(b2)
    cslab = cslab.at[:Cout, 11].set(b3)

    # Precompute the 8 off-center edge-validity masks (batch-invariant, DMA'd once).
    row = np.broadcast_to(np.arange(H)[:, None], (H, W))
    col = np.broadcast_to(np.arange(W)[None, :], (H, W))
    mask_rows = []
    for dy, dx in _OFFSETS:
        ok = np.ones((H, W), dtype=bool)
        if dy == -1:
            ok &= row >= 1
        if dy == 1:
            ok &= row < H - 1
        if dx == -1:
            ok &= col >= 1
        if dx == 1:
            ok &= col < W - 1
        mask_rows.append(ok.reshape(HW))
    masks = jnp.asarray(np.stack(mask_rows).astype(np.float32))     # (8, HW)

    # Whole batch in one grid step at these sizes (per-step overhead dominates otherwise).
    Bblk = B
    nb = B // Bblk

    kernel = functools.partial(
        _inverted_residual_kernel, Bblk=Bblk, Cout=Cout, H=H, W=W)

    out = pl.pallas_call(
        kernel,
        out_shape=jax.ShapeDtypeStruct((B, Cout, HW), jnp.float32),
        grid_spec=pltpu.PrefetchScalarGridSpec(
            num_scalar_prefetch=0,
            grid=(nb,),
            in_specs=[
                pl.BlockSpec((Bblk, Cin, HW), lambda b: (b, 0, 0)),
                pl.BlockSpec((hidden, Cin), lambda b: (0, 0)),
                pl.BlockSpec((Cout, hidden), lambda b: (0, 0)),
                pl.BlockSpec((hidden, _NCOL), lambda b: (0, 0)),
                pl.BlockSpec((8, HW), lambda b: (0, 0)),
            ],
            out_specs=pl.BlockSpec((Bblk, Cout, HW), lambda b: (b, 0, 0)),
        ),
        compiler_params=pltpu.CompilerParams(
            dimension_semantics=("parallel",),
            vmem_limit_bytes=32 * 1024 * 1024,
        ),
    )(x, w1f, w2f, cslab, masks)

    return out.reshape(B, Cout, H, W)                                # free reshape back


def make_params(key, in_channels, out_channels, expand_ratio=6, eps=1e-5):
    """Deterministic synthetic parameters matching the PyTorch module's shapes.
    BatchNorm layers are folded (inference mode) into per-channel scale/bias."""
    hidden = in_channels * expand_ratio
    keys = jax.random.split(key, 15)

    def bn_fold(kg, kb, km, kv, c):
        gamma = 1.0 + 0.1 * jax.random.normal(kg, (c,), jnp.float32)
        beta = 0.1 * jax.random.normal(kb, (c,), jnp.float32)
        mean = 0.1 * jax.random.normal(km, (c,), jnp.float32)
        var = jnp.abs(jax.random.normal(kv, (c,), jnp.float32)) + 0.5
        scale = gamma / jnp.sqrt(var + eps)
        bias = beta - mean * scale
        return scale, bias

    # PyTorch (hidden, Cin, 1, 1) -> (hidden, Cin)
    w1 = 0.1 * jax.random.normal(keys[0], (hidden, in_channels), jnp.float32)
    s1, b1 = bn_fold(keys[1], keys[2], keys[3], keys[4], hidden)
    # PyTorch depthwise (hidden, 1, 3, 3) -> (hidden, 3, 3)
    wdw = 0.1 * jax.random.normal(keys[5], (hidden, 3, 3), jnp.float32)
    s2, b2 = bn_fold(keys[6], keys[7], keys[8], keys[9], hidden)
    # PyTorch (Cout, hidden, 1, 1) -> (Cout, hidden)
    w2 = 0.1 * jax.random.normal(keys[10], (out_channels, hidden), jnp.float32)
    s3, b3 = bn_fold(keys[11], keys[12], keys[13], keys[14], out_channels)
    return (w1, s1, b1, wdw, s2, b2, w2, s3, b3)


def reference_forward(x, params):
    """Pure-JAX reference of the same forward (NCHW, inference-mode BN)."""
    (w1, s1, b1, wdw, s2, b2, w2, s3, b3) = params
    B, C, H, W = x.shape
    hp_prec = jax.lax.Precision.HIGHEST

    h = jnp.einsum('bchw,kc->bkhw', x, w1, precision=hp_prec)
    h = jnp.clip(h * s1[None, :, None, None] + b1[None, :, None, None], 0.0, 6.0)

    hp = jnp.pad(h, ((0, 0), (0, 0), (1, 1), (1, 1)))
    acc = jnp.zeros_like(h)
    for ky in range(3):
        for kx in range(3):
            tap = wdw[:, ky, kx].reshape(1, -1, 1, 1)
            acc = acc + hp[:, :, ky:ky + H, kx:kx + W] * tap
    y = jnp.clip(acc * s2[None, :, None, None] + b2[None, :, None, None], 0.0, 6.0)

    o = jnp.einsum('bkhw,ok->bohw', y, w2, precision=hp_prec)
    o = o * s3[None, :, None, None] + b3[None, :, None, None] + x
    return o


if __name__ == "__main__":
    # Small shapes: batch=2, in_channels=out_channels=4, spatial=16x16,
    # expand_ratio=6 -> hidden_dim=24, stride=1 (so the identity shortcut is valid).
    B, C, Hs, Ws = 2, 4, 16, 16
    key = jax.random.PRNGKey(0)
    kx, kp = jax.random.split(key)
    x = jax.random.normal(kx, (B, C, Hs, Ws), jnp.float32)
    params = make_params(kp, in_channels=C, out_channels=C, expand_ratio=6)

    out = jax.block_until_ready(inverted_residual_pallas(x, params))
    ref = jax.block_until_ready(reference_forward(x, params))
    np.testing.assert_allclose(np.asarray(out), np.asarray(ref), rtol=1e-4, atol=1e-4)

    print("KERNEL_OK")
</pallas_src>

<mosaic_0001>
module attributes {stable_mosaic.version = 11 : i64} {
  func.func @_inverted_residual_kernel(%arg0: i32, %arg1: memref<2x4x256xf32, #tpu.memory_space<vmem>>, %arg2: memref<24x4xf32, #tpu.memory_space<vmem>>, %arg3: memref<4x24xf32, #tpu.memory_space<vmem>>, %arg4: memref<24x16xf32, #tpu.memory_space<vmem>>, %arg5: memref<8x256xf32, #tpu.memory_space<vmem>>, %arg6: memref<2x4x256xf32, #tpu.memory_space<vmem>>) attributes {dimension_semantics = [#tpu.dimension_semantics<parallel>], iteration_bounds = array<i64: 1>, scalar_prefetch = 0 : i64, scratch_operands = 0 : i64, tpu.core_type = #tpu.core_type<tc>, window_params = [{transform_indices = @transform_0, window_bounds = array<i64: 2, 4, 256>}, {pipeline_mode = #tpu.pipeline_mode<synchronous>, transform_indices = @transform_1, window_bounds = array<i64: 24, 4>}, {pipeline_mode = #tpu.pipeline_mode<synchronous>, transform_indices = @transform_2, window_bounds = array<i64: 4, 24>}, {pipeline_mode = #tpu.pipeline_mode<synchronous>, transform_indices = @transform_3, window_bounds = array<i64: 24, 16>}, {pipeline_mode = #tpu.pipeline_mode<synchronous>, transform_indices = @transform_4, window_bounds = array<i64: 8, 256>}, {transform_indices = @transform_5, window_bounds = array<i64: 2, 4, 256>}]} {
    %c0 = arith.constant 0 : index
    %c0_0 = arith.constant 0 : index
    %0 = vector.load %arg2[%c0, %c0_0] : memref<24x4xf32, #tpu.memory_space<vmem>>, vector<24x4xf32>
    %c0_1 = arith.constant 0 : index
    %c0_2 = arith.constant 0 : index
    %1 = vector.load %arg3[%c0_1, %c0_2] : memref<4x24xf32, #tpu.memory_space<vmem>>, vector<4x24xf32>
    %c0_3 = arith.constant 0 : index
    %c0_4 = arith.constant 0 : index
    %2 = vector.load %arg4[%c0_3, %c0_4] : memref<24x16xf32, #tpu.memory_space<vmem>>, vector<24x1xf32>
    %c0_5 = arith.constant 0 : index
    %c1 = arith.constant 1 : index
    %3 = vector.load %arg4[%c0_5, %c1] : memref<24x16xf32, #tpu.memory_space<vmem>>, vector<24x1xf32>
    %c0_6 = arith.constant 0 : index
    %c2 = arith.constant 2 : index
    %4 = vector.load %arg4[%c0_6, %c2] : memref<24x16xf32, #tpu.memory_space<vmem>>, vector<24x1xf32>
    %c0_7 = arith.constant 0 : index
    %c3 = arith.constant 3 : index
    %5 = vector.load %arg4[%c0_7, %c3] : memref<24x16xf32, #tpu.memory_space<vmem>>, vector<24x1xf32>
    %c0_8 = arith.constant 0 : index
    %c4 = arith.constant 4 : index
    %6 = vector.load %arg4[%c0_8, %c4] : memref<24x16xf32, #tpu.memory_space<vmem>>, vector<24x1xf32>
    %c0_9 = arith.constant 0 : index
    %c5 = arith.constant 5 : index
    %7 = vector.load %arg4[%c0_9, %c5] : memref<24x16xf32, #tpu.memory_space<vmem>>, vector<24x1xf32>
    %c0_10 = arith.constant 0 : index
    %c6 = arith.constant 6 : index
    %8 = vector.load %arg4[%c0_10, %c6] : memref<24x16xf32, #tpu.memory_space<vmem>>, vector<24x1xf32>
    %c0_11 = arith.constant 0 : index
    %c7 = arith.constant 7 : index
    %9 = vector.load %arg4[%c0_11, %c7] : memref<24x16xf32, #tpu.memory_space<vmem>>, vector<24x1xf32>
    %c0_12 = arith.constant 0 : index
    %c8 = arith.constant 8 : index
    %10 = vector.load %arg4[%c0_12, %c8] : memref<24x16xf32, #tpu.memory_space<vmem>>, vector<24x1xf32>
    %c0_13 = arith.constant 0 : index
    %c9 = arith.constant 9 : index
    %11 = vector.load %arg4[%c0_13, %c9] : memref<24x16xf32, #tpu.memory_space<vmem>>, vector<24x1xf32>
    %c0_14 = arith.constant 0 : index
    %c10 = arith.constant 10 : index
    %12 = vector.load %arg4[%c0_14, %c10] : memref<24x16xf32, #tpu.memory_space<vmem>>, vector<24x1xf32>
    %c0_15 = arith.constant 0 : index
    %c11 = arith.constant 11 : index
    %13 = vector.load %arg4[%c0_15, %c11] : memref<24x16xf32, #tpu.memory_space<vmem>>, vector<4x1xf32>
    %c0_16 = arith.constant 0 : index
    %c0_17 = arith.constant 0 : index
    %14 = vector.load %arg5[%c0_16, %c0_17] : memref<8x256xf32, #tpu.memory_space<vmem>>, vector<1x256xf32>
    %c1_18 = arith.constant 1 : index
    %c0_19 = arith.constant 0 : index
    %15 = vector.load %arg5[%c1_18, %c0_19] : memref<8x256xf32, #tpu.memory_space<vmem>>, vector<1x256xf32>
    %c2_20 = arith.constant 2 : index
    %c0_21 = arith.constant 0 : index
    %16 = vector.load %arg5[%c2_20, %c0_21] : memref<8x256xf32, #tpu.memory_space<vmem>>, vector<1x256xf32>
    %c3_22 = arith.constant 3 : index
    %c0_23 = arith.constant 0 : index
    %17 = vector.load %arg5[%c3_22, %c0_23] : memref<8x256xf32, #tpu.memory_space<vmem>>, vector<1x256xf32>
    %c4_24 = arith.constant 4 : index
    %c0_25 = arith.constant 0 : index
    %18 = vector.load %arg5[%c4_24, %c0_25] : memref<8x256xf32, #tpu.memory_space<vmem>>, vector<1x256xf32>
    %c5_26 = arith.constant 5 : index
    %c0_27 = arith.constant 0 : index
    %19 = vector.load %arg5[%c5_26, %c0_27] : memref<8x256xf32, #tpu.memory_space<vmem>>, vector<1x256xf32>
    %c6_28 = arith.constant 6 : index
    %c0_29 = arith.constant 0 : index
    %20 = vector.load %arg5[%c6_28, %c0_29] : memref<8x256xf32, #tpu.memory_space<vmem>>, vector<1x256xf32>
    %c7_30 = arith.constant 7 : index
    %c0_31 = arith.constant 0 : index
    %21 = vector.load %arg5[%c7_30, %c0_31] : memref<8x256xf32, #tpu.memory_space<vmem>>, vector<1x256xf32>
    %c0_32 = arith.constant 0 : index
    %c0_33 = arith.constant 0 : index
    %c0_34 = arith.constant 0 : index
    %22 = vector.load %arg1[%c0_32, %c0_33, %c0_34] : memref<2x4x256xf32, #tpu.memory_space<vmem>>, vector<1x4x256xf32>
    %23 = vector.shape_cast %22 : vector<1x4x256xf32> to vector<4x256xf32>
    %cst = arith.constant dense<0.000000e+00> : vector<24x256xf32>
    %24 = tpu.matmul %0, %23, %cst {dimension_numbers = #tpu.dot_dimension_numbers<[1], [0], [0], [1], [0, 0, 1, 1], [], []>} : vector<24x4xf32>, vector<4x256xf32>, vector<24x256xf32> -> vector<24x256xf32>
    %25 = vector.broadcast %11 : vector<24x1xf32> to vector<24x256xf32>
    %26 = arith.addf %24, %25 : vector<24x256xf32>
    %cst_35 = arith.constant 0.000000e+00 : f32
    %cst_36 = arith.constant 6.000000e+00 : f32
    %27 = vector.broadcast %cst_35 : f32 to vector<24x256xf32>
    %28 = arith.maximumf %27, %26 : vector<24x256xf32>
    %29 = vector.broadcast %cst_36 : f32 to vector<24x256xf32>
    %30 = arith.minimumf %29, %28 : vector<24x256xf32>
    %31 = vector.broadcast %6 : vector<24x1xf32> to vector<24x256xf32>
    %32 = arith.mulf %30, %31 : vector<24x256xf32>
    %c17_i32 = arith.constant 17 : i32
    %33 = tpu.dynamic_rotate %30 by %c17_i32 dim 1 : vector<24x256xf32>, i32 -> vector<24x256xf32>
    %34 = vector.broadcast %14 : vector<1x256xf32> to vector<24x256xf32>
    %35 = arith.mulf %33, %34 : vector<24x256xf32>
    %36 = vector.broadcast %2 : vector<24x1xf32> to vector<24x256xf32>
    %37 = arith.mulf %35, %36 : vector<24x256xf32>
    %38 = arith.addf %32, %37 : vector<24x256xf32>
    %c16_i32 = arith.constant 16 : i32
    %39 = tpu.dynamic_rotate %30 by %c16_i32 dim 1 : vector<24x256xf32>, i32 -> vector<24x256xf32>
    %40 = vector.broadcast %15 : vector<1x256xf32> to vector<24x256xf32>
    %41 = arith.mulf %39, %40 : vector<24x256xf32>
    %42 = vector.broadcast %3 : vector<24x1xf32> to vector<24x256xf32>
    %43 = arith.mulf %41, %42 : vector<24x256xf32>
    %44 = arith.addf %38, %43 : vector<24x256xf32>
    %c15_i32 = arith.constant 15 : i32
    %45 = tpu.dynamic_rotate %30 by %c15_i32 dim 1 : vector<24x256xf32>, i32 -> vector<24x256xf32>
    %46 = vector.broadcast %16 : vector<1x256xf32> to vector<24x256xf32>
    %47 = arith.mulf %45, %46 : vector<24x256xf32>
    %48 = vector.broadcast %4 : vector<24x1xf32> to vector<24x256xf32>
    %49 = arith.mulf %47, %48 : vector<24x256xf32>
    %50 = arith.addf %44, %49 : vector<24x256xf32>
    %c1_i32 = arith.constant 1 : i32
    %51 = tpu.dynamic_rotate %30 by %c1_i32 dim 1 : vector<24x256xf32>, i32 -> vector<24x256xf32>
    %52 = vector.broadcast %17 : vector<1x256xf32> to vector<24x256xf32>
    %53 = arith.mulf %51, %52 : vector<24x256xf32>
    %54 = vector.broadcast %5 : vector<24x1xf32> to vector<24x256xf32>
    %55 = arith.mulf %53, %54 : vector<24x256xf32>
    %56 = arith.addf %50, %55 : vector<24x256xf32>
    %c255_i32 = arith.constant 255 : i32
    %57 = tpu.dynamic_rotate %30 by %c255_i32 dim 1 : vector<24x256xf32>, i32 -> vector<24x256xf32>
    %58 = vector.broadcast %18 : vector<1x256xf32> to vector<24x256xf32>
    %59 = arith.mulf %57, %58 : vector<24x256xf32>
    %60 = vector.broadcast %7 : vector<24x1xf32> to vector<24x256xf32>
    %61 = arith.mulf %59, %60 : vector<24x256xf32>
    %62 = arith.addf %56, %61 : vector<24x256xf32>
    %c241_i32 = arith.constant 241 : i32
    %63 = tpu.dynamic_rotate %30 by %c241_i32 dim 1 : vector<24x256xf32>, i32 -> vector<24x256xf32>
    %64 = vector.broadcast %19 : vector<1x256xf32> to vector<24x256xf32>
    %65 = arith.mulf %63, %64 : vector<24x256xf32>
    %66 = vector.broadcast %8 : vector<24x1xf32> to vector<24x256xf32>
    %67 = arith.mulf %65, %66 : vector<24x256xf32>
    %68 = arith.addf %62, %67 : vector<24x256xf32>
    %c240_i32 = arith.constant 240 : i32
    %69 = tpu.dynamic_rotate %30 by %c240_i32 dim 1 : vector<24x256xf32>, i32 -> vector<24x256xf32>
    %70 = vector.broadcast %20 : vector<1x256xf32> to vector<24x256xf32>
    %71 = arith.mulf %69, %70 : vector<24x256xf32>
    %72 = vector.broadcast %9 : vector<24x1xf32> to vector<24x256xf32>
    %73 = arith.mulf %71, %72 : vector<24x256xf32>
    %74 = arith.addf %68, %73 : vector<24x256xf32>
    %c239_i32 = arith.constant 239 : i32
    %75 = tpu.dynamic_rotate %30 by %c239_i32 dim 1 : vector<24x256xf32>, i32 -> vector<24x256xf32>
    %76 = vector.broadcast %21 : vector<1x256xf32> to vector<24x256xf32>
    %77 = arith.mulf %75, %76 : vector<24x256xf32>
    %78 = vector.broadcast %10 : vector<24x1xf32> to vector<24x256xf32>
    %79 = arith.mulf %77, %78 : vector<24x256xf32>
    %80 = arith.addf %74, %79 : vector<24x256xf32>
    %81 = vector.broadcast %12 : vector<24x1xf32> to vector<24x256xf32>
    %82 = arith.addf %80, %81 : vector<24x256xf32>
    %cst_37 = arith.constant 0.000000e+00 : f32
    %cst_38 = arith.constant 6.000000e+00 : f32
    %83 = vector.broadcast %cst_37 : f32 to vector<24x256xf32>
    %84 = arith.maximumf %83, %82 : vector<24x256xf32>
    %85 = vector.broadcast %cst_38 : f32 to vector<24x256xf32>
    %86 = arith.minimumf %85, %84 : vector<24x256xf32>
    %cst_39 = arith.constant dense<0.000000e+00> : vector<4x256xf32>
    %87 = tpu.matmul %1, %86, %cst_39 {dimension_numbers = #tpu.dot_dimension_numbers<[1], [0], [0], [1], [0, 0, 1, 1], [], []>} : vector<4x24xf32>, vector<24x256xf32>, vector<4x256xf32> -> vector<4x256xf32>
    %88 = vector.broadcast %13 : vector<4x1xf32> to vector<4x256xf32>
    %89 = arith.addf %87, %88 : vector<4x256xf32>
    %90 = arith.addf %89, %23 : vector<4x256xf32>
    %c0_40 = arith.constant 0 : index
    %c0_41 = arith.constant 0 : index
    %c0_42 = arith.constant 0 : index
    %91 = vector.load %arg6[%c0_40, %c0_41, %c0_42] : memref<2x4x256xf32, #tpu.memory_space<vmem>>, vector<1x4x256xf32>
    %92 = vector.shape_cast %91 : vector<1x4x256xf32> to vector<4x256xf32>
    %93 = vector.shape_cast %90 : vector<4x256xf32> to vector<1x4x256xf32>
    tpu.vector_store %arg6[%c0_40, %c0_41, %c0_42], %93 {strides = array<i32>} : memref<2x4x256xf32, #tpu.memory_space<vmem>>, vector<1x4x256xf32>,
    %c1_43 = arith.constant 1 : index
    %c0_44 = arith.constant 0 : index
    %c0_45 = arith.constant 0 : index
    %94 = vector.load %arg1[%c1_43, %c0_44, %c0_45] : memref<2x4x256xf32, #tpu.memory_space<vmem>>, vector<1x4x256xf32>
    %95 = vector.shape_cast %94 : vector<1x4x256xf32> to vector<4x256xf32>
    %cst_46 = arith.constant dense<0.000000e+00> : vector<24x256xf32>
    %96 = tpu.matmul %0, %95, %cst_46 {dimension_numbers = #tpu.dot_dimension_numbers<[1], [0], [0], [1], [0, 0, 1, 1], [], []>} : vector<24x4xf32>, vector<4x256xf32>, vector<24x256xf32> -> vector<24x256xf32>
    %97 = vector.broadcast %11 : vector<24x1xf32> to vector<24x256xf32>
    %98 = arith.addf %96, %97 : vector<24x256xf32>
    %cst_47 = arith.constant 0.000000e+00 : f32
    %cst_48 = arith.constant 6.000000e+00 : f32
    %99 = vector.broadcast %cst_47 : f32 to vector<24x256xf32>
    %100 = arith.maximumf %99, %98 : vector<24x256xf32>
    %101 = vector.broadcast %cst_48 : f32 to vector<24x256xf32>
    %102 = arith.minimumf %101, %100 : vector<24x256xf32>
    %103 = vector.broadcast %6 : vector<24x1xf32> to vector<24x256xf32>
    %104 = arith.mulf %102, %103 : vector<24x256xf32>
    %c17_i32_49 = arith.constant 17 : i32
    %105 = tpu.dynamic_rotate %102 by %c17_i32_49 dim 1 : vector<24x256xf32>, i32 -> vector<24x256xf32>
    %106 = vector.broadcast %14 : vector<1x256xf32> to vector<24x256xf32>
    %107 = arith.mulf %105, %106 : vector<24x256xf32>
    %108 = vector.broadcast %2 : vector<24x1xf32> to vector<24x256xf32>
    %109 = arith.mulf %107, %108 : vector<24x256xf32>
    %110 = arith.addf %104, %109 : vector<24x256xf32>
    %c16_i32_50 = arith.constant 16 : i32
    %111 = tpu.dynamic_rotate %102 by %c16_i32_50 dim 1 : vector<24x256xf32>, i32 -> vector<24x256xf32>
    %112 = vector.broadcast %15 : vector<1x256xf32> to vector<24x256xf32>
    %113 = arith.mulf %111, %112 : vector<24x256xf32>
    %114 = vector.broadcast %3 : vector<24x1xf32> to vector<24x256xf32>
    %115 = arith.mulf %113, %114 : vector<24x256xf32>
    %116 = arith.addf %110, %115 : vector<24x256xf32>
    %c15_i32_51 = arith.constant 15 : i32
    %117 = tpu.dynamic_rotate %102 by %c15_i32_51 dim 1 : vector<24x256xf32>, i32 -> vector<24x256xf32>
    %118 = vector.broadcast %16 : vector<1x256xf32> to vector<24x256xf32>
    %119 = arith.mulf %117, %118 : vector<24x256xf32>
    %120 = vector.broadcast %4 : vector<24x1xf32> to vector<24x256xf32>
    %121 = arith.mulf %119, %120 : vector<24x256xf32>
    %122 = arith.addf %116, %121 : vector<24x256xf32>
    %c1_i32_52 = arith.constant 1 : i32
    %123 = tpu.dynamic_rotate %102 by %c1_i32_52 dim 1 : vector<24x256xf32>, i32 -> vector<24x256xf32>
    %124 = vector.broadcast %17 : vector<1x256xf32> to vector<24x256xf32>
    %125 = arith.mulf %123, %124 : vector<24x256xf32>
    %126 = vector.broadcast %5 : vector<24x1xf32> to vector<24x256xf32>
    %127 = arith.mulf %125, %126 : vector<24x256xf32>
    %128 = arith.addf %122, %127 : vector<24x256xf32>
    %c255_i32_53 = arith.constant 255 : i32
    %129 = tpu.dynamic_rotate %102 by %c255_i32_53 dim 1 : vector<24x256xf32>, i32 -> vector<24x256xf32>
    %130 = vector.broadcast %18 : vector<1x256xf32> to vector<24x256xf32>
    %131 = arith.mulf %129, %130 : vector<24x256xf32>
    %132 = vector.broadcast %7 : vector<24x1xf32> to vector<24x256xf32>
    %133 = arith.mulf %131, %132 : vector<24x256xf32>
    %134 = arith.addf %128, %133 : vector<24x256xf32>
    %c241_i32_54 = arith.constant 241 : i32
    %135 = tpu.dynamic_rotate %102 by %c241_i32_54 dim 1 : vector<24x256xf32>, i32 -> vector<24x256xf32>
    %136 = vector.broadcast %19 : vector<1x256xf32> to vector<24x256xf32>
    %137 = arith.mulf %135, %136 : vector<24x256xf32>
    %138 = vector.broadcast %8 : vector<24x1xf32> to vector<24x256xf32>
    %139 = arith.mulf %137, %138 : vector<24x256xf32>
    %140 = arith.addf %134, %139 : vector<24x256xf32>
    %c240_i32_55 = arith.constant 240 : i32
    %141 = tpu.dynamic_rotate %102 by %c240_i32_55 dim 1 : vector<24x256xf32>, i32 -> vector<24x256xf32>
    %142 = vector.broadcast %20 : vector<1x256xf32> to vector<24x256xf32>
    %143 = arith.mulf %141, %142 : vector<24x256xf32>
    %144 = vector.broadcast %9 : vector<24x1xf32> to vector<24x256xf32>
    %145 = arith.mulf %143, %144 : vector<24x256xf32>
    %146 = arith.addf %140, %145 : vector<24x256xf32>
    %c239_i32_56 = arith.constant 239 : i32
    %147 = tpu.dynamic_rotate %102 by %c239_i32_56 dim 1 : vector<24x256xf32>, i32 -> vector<24x256xf32>
    %148 = vector.broadcast %21 : vector<1x256xf32> to vector<24x256xf32>
    %149 = arith.mulf %147, %148 : vector<24x256xf32>
    %150 = vector.broadcast %10 : vector<24x1xf32> to vector<24x256xf32>
    %151 = arith.mulf %149, %150 : vector<24x256xf32>
    %152 = arith.addf %146, %151 : vector<24x256xf32>
    %153 = vector.broadcast %12 : vector<24x1xf32> to vector<24x256xf32>
    %154 = arith.addf %152, %153 : vector<24x256xf32>
    %cst_57 = arith.constant 0.000000e+00 : f32
    %cst_58 = arith.constant 6.000000e+00 : f32
    %155 = vector.broadcast %cst_57 : f32 to vector<24x256xf32>
    %156 = arith.maximumf %155, %154 : vector<24x256xf32>
    %157 = vector.broadcast %cst_58 : f32 to vector<24x256xf32>
    %158 = arith.minimumf %157, %156 : vector<24x256xf32>
    %cst_59 = arith.constant dense<0.000000e+00> : vector<4x256xf32>
    %159 = tpu.matmul %1, %158, %cst_59 {dimension_numbers = #tpu.dot_dimension_numbers<[1], [0], [0], [1], [0, 0, 1, 1], [], []>} : vector<4x24xf32>, vector<24x256xf32>, vector<4x256xf32> -> vector<4x256xf32>
    %160 = vector.broadcast %13 : vector<4x1xf32> to vector<4x256xf32>
    %161 = arith.addf %159, %160 : vector<4x256xf32>
    %162 = arith.addf %161, %95 : vector<4x256xf32>
    %c1_60 = arith.constant 1 : index
    %c0_61 = arith.constant 0 : index
    %c0_62 = arith.constant 0 : index
    %163 = vector.load %arg6[%c1_60, %c0_61, %c0_62] : memref<2x4x256xf32, #tpu.memory_space<vmem>>, vector<1x4x256xf32>
    %164 = vector.shape_cast %163 : vector<1x4x256xf32> to vector<4x256xf32>
    %165 = vector.shape_cast %162 : vector<4x256xf32> to vector<1x4x256xf32>
    tpu.vector_store %arg6[%c1_60, %c0_61, %c0_62], %165 {strides = array<i32>} : memref<2x4x256xf32, #tpu.memory_space<vmem>>, vector<1x4x256xf32>,
    return
  }
  func.func @transform_0(%arg0: i32) -> (i32, i32, i32) {
    %c0_i32 = arith.constant 0 : i32
    %c0_i32_0 = arith.constant 0 : i32
    %c0_i32_1 = arith.constant 0 : i32
    return %arg0, %c0_i32, %c0_i32_0 : i32, i32, i32
  }
  func.func @transform_1(%arg0: i32) -> (i32, i32) {
    %c0_i32 = arith.constant 0 : i32
    %c0_i32_0 = arith.constant 0 : i32
    %c0_i32_1 = arith.constant 0 : i32
    return %c0_i32, %c0_i32_0 : i32, i32
  }
  func.func @transform_2(%arg0: i32) -> (i32, i32) {
    %c0_i32 = arith.constant 0 : i32
    %c0_i32_0 = arith.constant 0 : i32
    %c0_i32_1 = arith.constant 0 : i32
    return %c0_i32, %c0_i32_0 : i32, i32
  }
  func.func @transform_3(%arg0: i32) -> (i32, i32) {
    %c0_i32 = arith.constant 0 : i32
    %c0_i32_0 = arith.constant 0 : i32
    %c0_i32_1 = arith.constant 0 : i32
    return %c0_i32, %c0_i32_0 : i32, i32
  }
  func.func @transform_4(%arg0: i32) -> (i32, i32) {
    %c0_i32 = arith.constant 0 : i32
    %c0_i32_0 = arith.constant 0 : i32
    %c0_i32_1 = arith.constant 0 : i32
    return %c0_i32, %c0_i32_0 : i32, i32
  }
  func.func @transform_5(%arg0: i32) -> (i32, i32, i32) {
    %c0_i32 = arith.constant 0 : i32
    %c0_i32_0 = arith.constant 0 : i32
    %c0_i32_1 = arith.constant 0 : i32
    return %arg0, %c0_i32, %c0_i32_0 : i32, i32, i32
  }
}

</mosaic_0001>

<llo_original>
// kernel: tpu_custom_call.1
$region0: #{tpu_custom_call.1}
  #allocation0 [shape = 'u32[]', space=smem, size = 0x4, offset = 0x4, fixed_abs, tag = 'smem constant byte address 0x4 - core index']
  #allocation1 [shape = 'u32[144,128]{1,0:T(1,128)}', space=vmem, size = 0x12000, scoped, tag = 'internal scratch']
  %s0 = inlined_call_operand.vmem [shape: f32[2,4,256], index: 0, kind: input, shape index: {}]
  %s1 = inlined_call_operand.vmem [shape: f32[24,4], index: 1, kind: input, shape index: {}]
  %s2 = inlined_call_operand.vmem [shape: f32[4,24], index: 2, kind: input, shape index: {}]
  %s3 = inlined_call_operand.vmem [shape: f32[24,16], index: 3, kind: input, shape index: {}]
  %s4 = inlined_call_operand.vmem [shape: f32[8,256], index: 4, kind: input, shape index: {}]
  %s5 = inlined_call_operand.hbm [shape: f32[2,4,256], index: 5, kind: output, shape index: {}]
  %s6 = sld [smem:[#allocation0]]
  $region30: #{tpu_custom_call.1} parent=0
    _
  %s8 = ssub.s32 1, %s6
  %s9 = scalar_select 0, %s8, %s6
  $region1: #{tpu_custom_call.1} parent=0
    #allocation2 [shape = 'u8[8192]{0}', space=vmem, size = 0x2000, scoped, tag = 'output window, operand 0, single buffered']
    #allocation3 [shape = 's32[1]{0}', space=sflag, size = 0x4, scoped, tag = 'scoped memory for tpu_custom_call.1']
    %10 = vsyncpa [#allocation3], 0
    // Predicated region
    $region2: #{tpu_custom_call.1} parent=1 // pred_check
      _
    $region3: #{tpu_custom_call.1} parent=1 // pred_check_branch
      %12 = sbr.rel (0) target = $region5
    $region4: #{tpu_custom_call.1} parent=1 // pred_region
      _
    $region5: #{tpu_custom_call.1} parent=1 // pred_fallthru
      _
    // Predicated region
    $region6: #{tpu_custom_call.1} parent=1 // pred_check
      _
    $region7: #{tpu_custom_call.1} parent=1 // pred_check_branch
      %14 = sbr.rel (0) target = $region9
    $region8: #{tpu_custom_call.1} parent=1 // pred_region
      _
    $region9: #{tpu_custom_call.1} parent=1 // pred_fallthru
      _
    // Predicated region
    $region10: #{tpu_custom_call.1} parent=1 // pred_check
      _
    $region11: #{tpu_custom_call.1} parent=1 // pred_check_branch
      %16 = sbr.rel (0) target = $region13
    $region12: #{tpu_custom_call.1} parent=1 // pred_region
      _
    $region13: #{tpu_custom_call.1} parent=1 // pred_fallthru
      _
    // Predicated region
    $region14: #{tpu_custom_call.1} parent=1 // pred_check
      _
    $region15: #{tpu_custom_call.1} parent=1 // pred_check_branch
      %18 = sbr.rel (0) target = $region17
    $region16: #{tpu_custom_call.1} parent=1 // pred_region
      _
    $region17: #{tpu_custom_call.1} parent=1 // pred_fallthru
      _
    // Predicated region
    $region18: #{tpu_custom_call.1} parent=1 // pred_check
      _
    $region19: #{tpu_custom_call.1} parent=1 // pred_check_branch
      %20 = sbr.rel (0) target = $region21
    $region20: #{tpu_custom_call.1} parent=1 // pred_region
      _
    $region21: #{tpu_custom_call.1} parent=1 // pred_fallthru
      _
    %v21 = vld [vmem:[%s1] sm:$0xff]
    %v22 = vld [vmem:[%s1 + $0x8] sm:$0xff]
    %v23 = vld [vmem:[%s1 + $0x10] sm:$0xff]
    %v24 = vld [vmem:[%s2] sm:$0xf]
    %v25 = vld [vmem:[%s3] sm:$0xff]
    %v26 = vld [vmem:[%s3 + $0x8] sm:$0xff]
    %v27 = vld [vmem:[%s3 + $0x10] sm:$0xff]
    %v28 = vld [vmem:[%s3] sm:$0xf]
    %v29 = vld [vmem:[%s4] ss:$8 sm:$0x3]
    %s30 = scalar_lea.vmem %s4, 1
    %v31 = vld [vmem:[%s30] ss:$8 sm:$0x3]
    %s32 = scalar_lea.vmem %s4, 2
    %v33 = vld [vmem:[%s32] ss:$8 sm:$0x3]
    %s34 = scalar_lea.vmem %s4, 3
    %v35 = vld [vmem:[%s34] ss:$8 sm:$0x3]
    %s36 = scalar_lea.vmem %s4, 4
    %v37 = vld [vmem:[%s36] ss:$8 sm:$0x3]
    %s38 = scalar_lea.vmem %s4, 5
    %v39 = vld [vmem:[%s38] ss:$8 sm:$0x3]
    %s40 = scalar_lea.vmem %s4, 6
    %v41 = vld [vmem:[%s40] ss:$8 sm:$0x3]
    %s42 = scalar_lea.vmem %s4, 7
    %v43 = vld [vmem:[%s42] ss:$8 sm:$0x3]
    %v44 = vld [vmem:[%s0] sm:$0xff]
    %46 = vset.pattern.permute.xlu0 9
    %47 = vperm.xlu0 %46, %v25
    %v48 = vpop.permute.xlu0 %47
    %51 = vset.pattern.permute.xlu0 9
    %52 = vperm.xlu0 %51, %v26
    %v53 = vpop.permute.xlu0 %52
    %56 = vset.pattern.permute.xlu0 9
    %57 = vperm.xlu0 %56, %v27
    %v58 = vpop.permute.xlu0 %57
    %v61 = vcombine.high %v44, %v44
    %vm62 = vcmask 31744
    %v64 = vsel %vm62, %v21, 0
    %v67 = vsel %vm62, %v22, 0
    %v70 = vsel %vm62, %v23, 0
    %vm72 = vcmask 1043456
    %v73 = vsel %vm72, %v44, 0
    %v75 = vsel %vm72, %v61, 0
    %77 = vmatprep.subr.mxu0 %v75
    %78 = vmatpush1.msra.mxu0 %v73
    %79 = vmatprep.subr.mxu0 0.0
    %80 = vmatpush1.msra.mxu0 0.0
    %81 = vmatprep.subr.mxu0 0.0
    %82 = vmatpush1.msra.mxu0 0.0
    %83 = vmatprep.subr.mxu0 0.0
    %84 = vmatpush1.msra.mxu0 0.0
    %85 = vmatprep.subr.mxu0 0.0
    %86 = vmatpush1.msra.mxu0 0.0
    %87 = vmatprep.subr.mxu0 0.0
    %88 = vmatpush1.msra.mxu0 0.0
    %89 = vmatprep.subr.mxu0 0.0
    %90 = vmatpush1.msra.mxu0 0.0
    %91 = vmatprep.subr.mxu0 0.0
    %92 = vmatpush1.msra.mxu0 0.0
    %93 = vmatprep.subr.mxu0 0.0
    %94 = vmatpush1.msra.mxu0 0.0
    %95 = vmatprep.subr.mxu0 0.0
    %96 = vmatpush1.msra.mxu0 0.0
    %97 = vmatprep.subr.mxu0 0.0
    %98 = vmatpush1.msra.mxu0 0.0
    %99 = vmatprep.subr.mxu0 0.0
    %100 = vmatpush1.msra.mxu0 0.0
    %101 = vmatprep.subr.mxu0 0.0
    %102 = vmatpush1.msra.mxu0 0.0
    %103 = vmatprep.subr.mxu0 0.0
    %104 = vmatpush1.msra.mxu0 0.0
    %105 = vmatprep.subr.mxu0 0.0
    %106 = vmatpush1.msra.mxu0 0.0
    %107 = vmatprep.subr.mxu0 0.0
    %108 = vmatpush1.msra.mxu0 0.0
    %109 = vmatprep.subr.mxu0 0.0
    %110 = vmatpush1.msra.mxu0 0.0
    %111 = vmatprep.subr.mxu0 0.0
    %112 = vmatpush1.msra.mxu0 0.0
    %113 = vmatprep.subr.mxu0 0.0
    %114 = vmatpush1.msra.mxu0 0.0
    %115 = vmatprep.subr.mxu0 0.0
    %116 = vmatpush1.msra.mxu0 0.0
    %117 = vmatprep.subr.mxu0 0.0
    %118 = vmatpush1.msra.mxu0 0.0
    %119 = vmatprep.subr.mxu0 0.0
    %120 = vmatpush1.msra.mxu0 0.0
    %121 = vmatprep.subr.mxu0 0.0
    %122 = vmatpush1.msra.mxu0 0.0
    %123 = vmatprep.subr.mxu0 0.0
    %124 = vmatpush1.msra.mxu0 0.0
    %125 = vmatprep.subr.mxu0 0.0
    %126 = vmatpush1.msra.mxu0 0.0
    %127 = vmatprep.subr.mxu0 0.0
    %128 = vmatpush1.msra.mxu0 0.0
    %129 = vmatprep.subr.mxu0 0.0
    %130 = vmatpush1.msra.mxu0 0.0
    %131 = vmatprep.subr.mxu0 0.0
    %132 = vmatpush1.msra.mxu0 0.0
    %133 = vmatprep.subr.mxu0 0.0
    %134 = vmatpush1.msra.mxu0 0.0
    %135 = vmatprep.subr.mxu0 0.0
    %136 = vmatpush1.msra.mxu0 0.0
    %137 = vmatprep.subr.mxu0 0.0
    %138 = vmatpush1.msra.mxu0 0.0
    %139 = vmatprep.subr.mxu0 0.0
    %140 = vmatpush1.msra.mxu0 0.0
    %141 = vmatprep.mubr.f32.mxu0 0.0
    %142 = vmatmul.mubr.f32.gmra.mrb[0].mxu0 %v64
    %v143 = vpop.f32.mrb[0].mxu0
    %v144 = vadd.f32 %v48, %v143
    %v145 = vpop.f32.mrb[0].mxu0
    %v146 = vadd.f32 %v48, %v145
    %147 = vmatprep.mubr.f32.mxu0 0.0
    %148 = vmatmul.mubr.f32.gmra.mrb[0].mxu0 %v67
    %v149 = vpop.f32.mrb[0].mxu0
    %v150 = vadd.f32 %v53, %v149
    %v151 = vpop.f32.mrb[0].mxu0
    %v152 = vadd.f32 %v53, %v151
    %153 = vmatprep.mubr.f32.mxu0 0.0
    %154 = vmatmul.mubr.f32.gmra.mrb[0].mxu0 %v70
    %v155 = vpop.f32.mrb[0].mxu0
    %v156 = vadd.f32 %v58, %v155
    %v157 = vpop.f32.mrb[0].mxu0
    %v158 = vadd.f32 %v58, %v157
    %159 = vdwg.mxu0
    %v160 = vmax.f32 %v144, 0.0
    %v161 = vmax.f32 %v146, 0.0
    %v162 = vmax.f32 %v150, 0.0
    %v163 = vmax.f32 %v152, 0.0
    %v164 = vmax.f32 %v156, 0.0
    %v165 = vmax.f32 %v158, 0.0
    %v166 = vmin.f32 %v160, 6.0
    %v167 = vmin.f32 %v161, 6.0
    %v168 = vmin.f32 %v162, 6.0
    %v169 = vmin.f32 %v163, 6.0
    %v170 = vmin.f32 %v164, 6.0
    %v171 = vmin.f32 %v165, 6.0
    %172 = vset.pattern.permute.xlu0 4
    %173 = vperm.xlu0 %172, %v25
    %v174 = vpop.permute.xlu0 %173
    %176 = vset.pattern.permute.xlu0 4
    %177 = vperm.xlu0 %176, %v26
    %v178 = vpop.permute.xlu0 %177
    %180 = vset.pattern.permute.xlu0 4
    %181 = vperm.xlu0 %180, %v27
    %v182 = vpop.permute.xlu0 %181
    %v184 = vmul.f32 %v166, %v174
    %v185 = vmul.f32 %v167, %v174
    %v186 = vmul.f32 %v168, %v178
    %v187 = vmul.f32 %v169, %v178
    %v188 = vmul.f32 %v170, %v182
    %v189 = vmul.f32 %v171, %v182
    %190 = vrot.lane.b32.xlu0 %v166, 17
    %v191 = vpop.permute.xlu0 %190
    %192 = vrot.lane.b32.xlu0 %v168, 17
    %v193 = vpop.permute.xlu0 %192
    %194 = vrot.lane.b32.xlu0 %v170, 17
    %v195 = vpop.permute.xlu0 %194
    %196 = vrot.lane.b32.xlu0 %v167, 17
    %v197 = vpop.permute.xlu0 %196
    %198 = vrot.lane.b32.xlu0 %v169, 17
    %v199 = vpop.permute.xlu0 %198
    %200 = vrot.lane.b32.xlu0 %v171, 17
    %v201 = vpop.permute.xlu0 %200
    %v202 = vlaneseq
    %v203 = vand.u32 %v202, 127
    %vm204 = vcmp.lt.s32.totalorder %v203, 17
    %v205 = vsel %vm204, %v191, %v197
    %v206 = vsel %vm204, %v193, %v199
    %v207 = vsel %vm204, %v195, %v201
    %v208 = vsel %vm204, %v197, %v191
    %v209 = vsel %vm204, %v199, %v193
    %v210 = vsel %vm204, %v201, %v195
    %v212 = vlaneseq
    %v213 = vshrl.u32 %v212, 7
    %v214 = vsub.s32 0, %v213
    %v215 = vrot.slane %v29, %v214
    %v216 = vlaneseq
    %v217 = vshrl.u32 %v216, 7
    %v218 = vsub.s32 1, %v217
    %v219 = vrot.slane %v29, %v218
    %v222 = vmul.f32 %v208, %v215
    %v223 = vmul.f32 %v205, %v219
    %v224 = vmul.f32 %v209, %v215
    %v225 = vmul.f32 %v206, %v219
    %v226 = vmul.f32 %v210, %v215
    %v227 = vmul.f32 %v207, %v219
    %228 = vset.pattern.permute.xlu0 0
    %229 = vperm.xlu0 %228, %v25
    %v230 = vpop.permute.xlu0 %229
    %232 = vset.pattern.permute.xlu0 0
    %233 = vperm.xlu0 %232, %v26
    %v234 = vpop.permute.xlu0 %233
    %236 = vset.pattern.permute.xlu0 0
    %237 = vperm.xlu0 %236, %v27
    %v238 = vpop.permute.xlu0 %237
    %v240 = vmul.f32 %v222, %v230
    %v241 = vmul.f32 %v223, %v230
    %v242 = vmul.f32 %v224, %v234
    %v243 = vmul.f32 %v225, %v234
    %v244 = vmul.f32 %v226, %v238
    %v245 = vmul.f32 %v227, %v238
    %v246 = vadd.f32 %v184, %v240
    %v247 = vadd.f32 %v185, %v241
    %v248 = vadd.f32 %v186, %v242
    %v249 = vadd.f32 %v187, %v243
    %v250 = vadd.f32 %v188, %v244
    %v251 = vadd.f32 %v189, %v245
    %252 = vrot.lane.b32.xlu0 %v166, 16
    %v253 = vpop.permute.xlu0 %252
    %254 = vrot.lane.b32.xlu0 %v168, 16
    %v255 = vpop.permute.xlu0 %254
    %256 = vrot.lane.b32.xlu0 %v170, 16
    %v257 = vpop.permute.xlu0 %256
    %258 = vrot.lane.b32.xlu0 %v167, 16
    %v259 = vpop.permute.xlu0 %258
    %260 = vrot.lane.b32.xlu0 %v169, 16
    %v261 = vpop.permute.xlu0 %260
    %262 = vrot.lane.b32.xlu0 %v171, 16
    %v263 = vpop.permute.xlu0 %262
    %vm264 = vcmp.lt.s32.totalorder %v203, 16
    %v265 = vsel %vm264, %v253, %v259
    %v266 = vsel %vm264, %v255, %v261
    %v267 = vsel %vm264, %v257, %v263
    %v268 = vsel %vm264, %v259, %v253
    %v269 = vsel %vm264, %v261, %v255
    %v270 = vsel %vm264, %v263, %v257
    %v272 = vlaneseq
    %v273 = vshrl.u32 %v272, 7
    %v274 = vsub.s32 0, %v273
    %v275 = vrot.slane %v31, %v274
    %v276 = vlaneseq
    %v277 = vshrl.u32 %v276, 7
    %v278 = vsub.s32 1, %v277
    %v279 = vrot.slane %v31, %v278
    %v282 = vmul.f32 %v268, %v275
    %v283 = vmul.f32 %v265, %v279
    %v284 = vmul.f32 %v269, %v275
    %v285 = vmul.f32 %v266, %v279
    %v286 = vmul.f32 %v270, %v275
    %v287 = vmul.f32 %v267, %v279
    %288 = vset.pattern.permute.xlu0 1
    %289 = vperm.xlu0 %288, %v25
    %v290 = vpop.permute.xlu0 %289
    %292 = vset.pattern.permute.xlu0 1
    %293 = vperm.xlu0 %292, %v26
    %v294 = vpop.permute.xlu0 %293
    %296 = vset.pattern.permute.xlu0 1
    %297 = vperm.xlu0 %296, %v27
    %v298 = vpop.permute.xlu0 %297
    %v300 = vmul.f32 %v282, %v290
    %v301 = vmul.f32 %v283, %v290
    %v302 = vmul.f32 %v284, %v294
    %v303 = vmul.f32 %v285, %v294
    %v304 = vmul.f32 %v286, %v298
    %v305 = vmul.f32 %v287, %v298
    %v306 = vadd.f32 %v246, %v300
    %v307 = vadd.f32 %v247, %v301
    %v308 = vadd.f32 %v248, %v302
    %v309 = vadd.f32 %v249, %v303
    %v310 = vadd.f32 %v250, %v304
    %v311 = vadd.f32 %v251, %v305
    %312 = vrot.lane.b32.xlu0 %v166, 15
    %v313 = vpop.permute.xlu0 %312
    %314 = vrot.lane.b32.xlu0 %v168, 15
    %v315 = vpop.permute.xlu0 %314
    %316 = vrot.lane.b32.xlu0 %v170, 15
    %v317 = vpop.permute.xlu0 %316
    %318 = vrot.lane.b32.xlu0 %v167, 15
    %v319 = vpop.permute.xlu0 %318
    %320 = vrot.lane.b32.xlu0 %v169, 15
    %v321 = vpop.permute.xlu0 %320
    %322 = vrot.lane.b32.xlu0 %v171, 15
    %v323 = vpop.permute.xlu0 %322
    %vm324 = vcmp.lt.s32.totalorder %v203, 15
    %v325 = vsel %vm324, %v313, %v319
    %v326 = vsel %vm324, %v315, %v321
    %v327 = vsel %vm324, %v317, %v323
    %v328 = vsel %vm324, %v319, %v313
    %v329 = vsel %vm324, %v321, %v315
    %v330 = vsel %vm324, %v323, %v317
    %v332 = vlaneseq
    %v333 = vshrl.u32 %v332, 7
    %v334 = vsub.s32 0, %v333
    %v335 = vrot.slane %v33, %v334
    %v336 = vlaneseq
    %v337 = vshrl.u32 %v336, 7
    %v338 = vsub.s32 1, %v337
    %v339 = vrot.slane %v33, %v338
    %v342 = vmul.f32 %v328, %v335
    %v343 = vmul.f32 %v325, %v339
    %v344 = vmul.f32 %v329, %v335
    %v345 = vmul.f32 %v326, %v339
    %v346 = vmul.f32 %v330, %v335
    %v347 = vmul.f32 %v327, %v339
    %348 = vset.pattern.permute.xlu0 2
    %349 = vperm.xlu0 %348, %v25
    %v350 = vpop.permute.xlu0 %349
    %352 = vset.pattern.permute.xlu0 2
    %353 = vperm.xlu0 %352, %v26
    %v354 = vpop.permute.xlu0 %353
    %356 = vset.pattern.permute.xlu0 2
    %357 = vperm.xlu0 %356, %v27
    %v358 = vpop.permute.xlu0 %357
    %v360 = vmul.f32 %v342, %v350
    %v361 = vmul.f32 %v343, %v350
    %v362 = vmul.f32 %v344, %v354
    %v363 = vmul.f32 %v345, %v354
    %v364 = vmul.f32 %v346, %v358
    %v365 = vmul.f32 %v347, %v358
    %v366 = vadd.f32 %v306, %v360
    %v367 = vadd.f32 %v307, %v361
    %v368 = vadd.f32 %v308, %v362
    %v369 = vadd.f32 %v309, %v363
    %v370 = vadd.f32 %v310, %v364
    %v371 = vadd.f32 %v311, %v365
    %372 = vrot.lane.b32.xlu0 %v166, 1
    %v373 = vpop.permute.xlu0 %372
    %374 = vrot.lane.b32.xlu0 %v168, 1
    %v375 = vpop.permute.xlu0 %374
    %376 = vrot.lane.b32.xlu0 %v170, 1
    %v377 = vpop.permute.xlu0 %376
    %378 = vrot.lane.b32.xlu0 %v167, 1
    %v379 = vpop.permute.xlu0 %378
    %380 = vrot.lane.b32.xlu0 %v169, 1
    %v381 = vpop.permute.xlu0 %380
    %382 = vrot.lane.b32.xlu0 %v171, 1
    %v383 = vpop.permute.xlu0 %382
    %vm384 = vcmp.lt.s32.totalorder %v203, 1
    %v385 = vsel %vm384, %v373, %v379
    %v386 = vsel %vm384, %v375, %v381
    %v387 = vsel %vm384, %v377, %v383
    %v388 = vsel %vm384, %v379, %v373
    %v389 = vsel %vm384, %v381, %v375
    %v390 = vsel %vm384, %v383, %v377
    %v392 = vlaneseq
    %v393 = vshrl.u32 %v392, 7
    %v394 = vsub.s32 0, %v393
    %v395 = vrot.slane %v35, %v394
    %v396 = vlaneseq
    %v397 = vshrl.u32 %v396, 7
    %v398 = vsub.s32 1, %v397
    %v399 = vrot.slane %v35, %v398
    %v402 = vmul.f32 %v388, %v395
    %v403 = vmul.f32 %v385, %v399
    %v404 = vmul.f32 %v389, %v395
    %v405 = vmul.f32 %v386, %v399
    %v406 = vmul.f32 %v390, %v395
    %v407 = vmul.f32 %v387, %v399
    %408 = vset.pattern.permute.xlu0 3
    %409 = vperm.xlu0 %408, %v25
    %v410 = vpop.permute.xlu0 %409
    %412 = vset.pattern.permute.xlu0 3
    %413 = vperm.xlu0 %412, %v26
    %v414 = vpop.permute.xlu0 %413
    %416 = vset.pattern.permute.xlu0 3
    %417 = vperm.xlu0 %416, %v27
    %v418 = vpop.permute.xlu0 %417
    %v420 = vmul.f32 %v402, %v410
    %v421 = vmul.f32 %v403, %v410
    %v422 = vmul.f32 %v404, %v414
    %v423 = vmul.f32 %v405, %v414
    %v424 = vmul.f32 %v406, %v418
    %v425 = vmul.f32 %v407, %v418
    %v426 = vadd.f32 %v366, %v420
    %v427 = vadd.f32 %v367, %v421
    %v428 = vadd.f32 %v368, %v422
    %v429 = vadd.f32 %v369, %v423
    %v430 = vadd.f32 %v370, %v424
    %v431 = vadd.f32 %v371, %v425
    %432 = vrot.lane.b32.xlu0 %v166, 127
    %v433 = vpop.permute.xlu0 %432
    %434 = vrot.lane.b32.xlu0 %v168, 127
    %v435 = vpop.permute.xlu0 %434
    %436 = vrot.lane.b32.xlu0 %v170, 127
    %v437 = vpop.permute.xlu0 %436
    %438 = vrot.lane.b32.xlu0 %v167, 127
    %v439 = vpop.permute.xlu0 %438
    %440 = vrot.lane.b32.xlu0 %v169, 127
    %v441 = vpop.permute.xlu0 %440
    %442 = vrot.lane.b32.xlu0 %v171, 127
    %v443 = vpop.permute.xlu0 %442
    %vm444 = vcmp.lt.s32.totalorder %v203, 127
    %v445 = vsel %vm444, %v433, %v439
    %v446 = vsel %vm444, %v435, %v441
    %v447 = vsel %vm444, %v437, %v443
    %v448 = vsel %vm444, %v439, %v433
    %v449 = vsel %vm444, %v441, %v435
    %v450 = vsel %vm444, %v443, %v437
    %v452 = vlaneseq
    %v453 = vshrl.u32 %v452, 7
    %v454 = vsub.s32 0, %v453
    %v455 = vrot.slane %v37, %v454
    %v456 = vlaneseq
    %v457 = vshrl.u32 %v456, 7
    %v458 = vsub.s32 1, %v457
    %v459 = vrot.slane %v37, %v458
    %v462 = vmul.f32 %v445, %v455
    %v463 = vmul.f32 %v448, %v459
    %v464 = vmul.f32 %v446, %v455
    %v465 = vmul.f32 %v449, %v459
    %v466 = vmul.f32 %v447, %v455
    %v467 = vmul.f32 %v450, %v459
    %468 = vset.pattern.permute.xlu0 5
    %469 = vperm.xlu0 %468, %v25
    %v470 = vpop.permute.xlu0 %469
    %472 = vset.pattern.permute.xlu0 5
    %473 = vperm.xlu0 %472, %v26
    %v474 = vpop.permute.xlu0 %473
    %476 = vset.pattern.permute.xlu0 5
    %477 = vperm.xlu0 %476, %v27
    %v478 = vpop.permute.xlu0 %477
    %v480 = vmul.f32 %v462, %v470
    %v481 = vmul.f32 %v463, %v470
    %v482 = vmul.f32 %v464, %v474
    %v483 = vmul.f32 %v465, %v474
    %v484 = vmul.f32 %v466, %v478
    %v485 = vmul.f32 %v467, %v478
    %v486 = vadd.f32 %v426, %v480
    %v487 = vadd.f32 %v427, %v481
    %v488 = vadd.f32 %v428, %v482
    %v489 = vadd.f32 %v429, %v483
    %v490 = vadd.f32 %v430, %v484
    %v491 = vadd.f32 %v431, %v485
    %492 = vrot.lane.b32.xlu0 %v166, 113
    %v493 = vpop.permute.xlu0 %492
    %494 = vrot.lane.b32.xlu0 %v168, 113
    %v495 = vpop.permute.xlu0 %494
    %496 = vrot.lane.b32.xlu0 %v170, 113
    %v497 = vpop.permute.xlu0 %496
    %498 = vrot.lane.b32.xlu0 %v167, 113
    %v499 = vpop.permute.xlu0 %498
    %500 = vrot.lane.b32.xlu0 %v169, 113
    %v501 = vpop.permute.xlu0 %500
    %502 = vrot.lane.b32.xlu0 %v171, 113
    %v503 = vpop.permute.xlu0 %502
    %vm504 = vcmp.lt.s32.totalorder %v203, 113
    %v505 = vsel %vm504, %v493, %v499
    %v506 = vsel %vm504, %v495, %v501
    %v507 = vsel %vm504, %v497, %v503
    %v508 = vsel %vm504, %v499, %v493
    %v509 = vsel %vm504, %v501, %v495
    %v510 = vsel %vm504, %v503, %v497
    %v512 = vlaneseq
    %v513 = vshrl.u32 %v512, 7
    %v514 = vsub.s32 0, %v513
    %v515 = vrot.slane %v39, %v514
    %v516 = vlaneseq
    %v517 = vshrl.u32 %v516, 7
    %v518 = vsub.s32 1, %v517
    %v519 = vrot.slane %v39, %v518
    %v522 = vmul.f32 %v505, %v515
    %v523 = vmul.f32 %v508, %v519
    %v524 = vmul.f32 %v506, %v515
    %v525 = vmul.f32 %v509, %v519
    %v526 = vmul.f32 %v507, %v515
    %v527 = vmul.f32 %v510, %v519
    %528 = vset.pattern.permute.xlu0 6
    %529 = vperm.xlu0 %528, %v25
    %v530 = vpop.permute.xlu0 %529
    %532 = vset.pattern.permute.xlu0 6
    %533 = vperm.xlu0 %532, %v26
    %v534 = vpop.permute.xlu0 %533
    %536 = vset.pattern.permute.xlu0 6
    %537 = vperm.xlu0 %536, %v27
    %v538 = vpop.permute.xlu0 %537
    %v540 = vmul.f32 %v522, %v530
    %v541 = vmul.f32 %v523, %v530
    %v542 = vmul.f32 %v524, %v534
    %v543 = vmul.f32 %v525, %v534
    %v544 = vmul.f32 %v526, %v538
    %v545 = vmul.f32 %v527, %v538
    %v546 = vadd.f32 %v486, %v540
    %v547 = vadd.f32 %v487, %v541
    %v548 = vadd.f32 %v488, %v542
    %v549 = vadd.f32 %v489, %v543
    %v550 = vadd.f32 %v490, %v544
    %v551 = vadd.f32 %v491, %v545
    %552 = vrot.lane.b32.xlu0 %v166, 112
    %v553 = vpop.permute.xlu0 %552
    %554 = vrot.lane.b32.xlu0 %v168, 112
    %v555 = vpop.permute.xlu0 %554
    %556 = vrot.lane.b32.xlu0 %v170, 112
    %v557 = vpop.permute.xlu0 %556
    %558 = vrot.lane.b32.xlu0 %v167, 112
    %v559 = vpop.permute.xlu0 %558
    %560 = vrot.lane.b32.xlu0 %v169, 112
    %v561 = vpop.permute.xlu0 %560
    %562 = vrot.lane.b32.xlu0 %v171, 112
    %v563 = vpop.permute.xlu0 %562
    %vm564 = vcmp.lt.s32.totalorder %v203, 112
    %v565 = vsel %vm564, %v553, %v559
    %v566 = vsel %vm564, %v555, %v561
    %v567 = vsel %vm564, %v557, %v563
    %v568 = vsel %vm564, %v559, %v553
    %v569 = vsel %vm564, %v561, %v555
    %v570 = vsel %vm564, %v563, %v557
    %v572 = vlaneseq
    %v573 = vshrl.u32 %v572, 7
    %v574 = vsub.s32 0, %v573
    %v575 = vrot.slane %v41, %v574
    %v576 = vlaneseq
    %v577 = vshrl.u32 %v576, 7
    %v578 = vsub.s32 1, %v577
    %v579 = vrot.slane %v41, %v578
    %v582 = vmul.f32 %v565, %v575
    %v583 = vmul.f32 %v568, %v579
    %v584 = vmul.f32 %v566, %v575
    %v585 = vmul.f32 %v569, %v579
    %v586 = vmul.f32 %v567, %v575
    %v587 = vmul.f32 %v570, %v579
    %588 = vset.pattern.permute.xlu0 7
    %589 = vperm.xlu0 %588, %v25
    %v590 = vpop.permute.xlu0 %589
    %592 = vset.pattern.permute.xlu0 7
    %593 = vperm.xlu0 %592, %v26
    %v594 = vpop.permute.xlu0 %593
    %596 = vset.pattern.permute.xlu0 7
    %597 = vperm.xlu0 %596, %v27
    %v598 = vpop.permute.xlu0 %597
    %v600 = vmul.f32 %v582, %v590
    %v601 = vmul.f32 %v583, %v590
    %v602 = vmul.f32 %v584, %v594
    %v603 = vmul.f32 %v585, %v594
    %v604 = vmul.f32 %v586, %v598
    %v605 = vmul.f32 %v587, %v598
    %v606 = vadd.f32 %v546, %v600
    %v607 = vadd.f32 %v547, %v601
    %v608 = vadd.f32 %v548, %v602
    %v609 = vadd.f32 %v549, %v603
    %v610 = vadd.f32 %v550, %v604
    %v611 = vadd.f32 %v551, %v605
    %612 = vrot.lane.b32.xlu0 %v166, 111
    %v613 = vpop.permute.xlu0 %612
    %614 = vrot.lane.b32.xlu0 %v168, 111
    %v615 = vpop.permute.xlu0 %614
    %616 = vrot.lane.b32.xlu0 %v170, 111
    %v617 = vpop.permute.xlu0 %616
    %618 = vrot.lane.b32.xlu0 %v167, 111
    %v619 = vpop.permute.xlu0 %618
    %620 = vrot.lane.b32.xlu0 %v169, 111
    %v621 = vpop.permute.xlu0 %620
    %622 = vrot.lane.b32.xlu0 %v171, 111
    %v623 = vpop.permute.xlu0 %622
    %vm624 = vcmp.lt.s32.totalorder %v203, 111
    %v625 = vsel %vm624, %v613, %v619
    %v626 = vsel %vm624, %v615, %v621
    %v627 = vsel %vm624, %v617, %v623
    %v628 = vsel %vm624, %v619, %v613
    %v629 = vsel %vm624, %v621, %v615
    %v630 = vsel %vm624, %v623, %v617
    %v632 = vlaneseq
    %v633 = vshrl.u32 %v632, 7
    %v634 = vsub.s32 0, %v633
    %v635 = vrot.slane %v43, %v634
    %v636 = vlaneseq
    %v637 = vshrl.u32 %v636, 7
    %v638 = vsub.s32 1, %v637
    %v639 = vrot.slane %v43, %v638
    %v642 = vmul.f32 %v625, %v635
    %v643 = vmul.f32 %v628, %v639
    %v644 = vmul.f32 %v626, %v635
    %v645 = vmul.f32 %v629, %v639
    %v646 = vmul.f32 %v627, %v635
    %v647 = vmul.f32 %v630, %v639
    %648 = vset.pattern.permute.xlu0 8
    %649 = vperm.xlu0 %648, %v25
    %v650 = vpop.permute.xlu0 %649
    %652 = vset.pattern.permute.xlu0 8
    %653 = vperm.xlu0 %652, %v26
    %v654 = vpop.permute.xlu0 %653
    %656 = vset.pattern.permute.xlu0 8
    %657 = vperm.xlu0 %656, %v27
    %v658 = vpop.permute.xlu0 %657
    %v660 = vmul.f32 %v642, %v650
    %v661 = vmul.f32 %v643, %v650
    %v662 = vmul.f32 %v644, %v654
    %v663 = vmul.f32 %v645, %v654
    %v664 = vmul.f32 %v646, %v658
    %v665 = vmul.f32 %v647, %v658
    %v666 = vadd.f32 %v606, %v660
    %v667 = vadd.f32 %v607, %v661
    %v668 = vadd.f32 %v608, %v662
    %v669 = vadd.f32 %v609, %v663
    %v670 = vadd.f32 %v610, %v664
    %v671 = vadd.f32 %v611, %v665
    %672 = vset.pattern.permute.xlu0 10
    %673 = vperm.xlu0 %672, %v25
    %v674 = vpop.permute.xlu0 %673
    %676 = vset.pattern.permute.xlu0 10
    %677 = vperm.xlu0 %676, %v26
    %v678 = vpop.permute.xlu0 %677
    %680 = vset.pattern.permute.xlu0 10
    %681 = vperm.xlu0 %680, %v27
    %v682 = vpop.permute.xlu0 %681
    %v684 = vadd.f32 %v666, %v674
    %v685 = vadd.f32 %v667, %v674
    %v686 = vadd.f32 %v668, %v678
    %v687 = vadd.f32 %v669, %v678
    %v688 = vadd.f32 %v670, %v682
    %v689 = vadd.f32 %v671, %v682
    %v690 = vmax.f32 %v684, 0.0
    %v691 = vmax.f32 %v685, 0.0
    %v692 = vmax.f32 %v686, 0.0
    %v693 = vmax.f32 %v687, 0.0
    %v694 = vmax.f32 %v688, 0.0
    %v695 = vmax.f32 %v689, 0.0
    %v696 = vmin.f32 %v690, 6.0
    %v697 = vmin.f32 %v691, 6.0
    %v698 = vmin.f32 %v692, 6.0
    %v699 = vmin.f32 %v693, 6.0
    %v700 = vmin.f32 %v694, 6.0
    %v701 = vmin.f32 %v695, 6.0
    %703 = vset.pattern.permute.xlu0 11
    %704 = vperm.xlu0 %703, %v28
    %v705 = vpop.permute.xlu0 %704
    %vm707 = vcmask 195584
    %v709 = vsel %vm707, %v24, 0
    %711 = vmatprep.subr.mxu0 %v697
    %712 = vmatpush1.msra.mxu0 %v696
    %713 = vmatprep.subr.mxu0 %v699
    %714 = vmatpush1.msra.mxu0 %v698
    %715 = vmatprep.subr.mxu0 %v701
    %716 = vmatpush1.msra.mxu0 %v700
    %717 = vmatprep.subr.mxu0 0.0
    %718 = vmatpush1.msra.mxu0 0.0
    %719 = vmatprep.subr.mxu0 0.0
    %720 = vmatpush1.msra.mxu0 0.0
    %721 = vmatprep.subr.mxu0 0.0
    %722 = vmatpush1.msra.mxu0 0.0
    %723 = vmatprep.subr.mxu0 0.0
    %724 = vmatpush1.msra.mxu0 0.0
    %725 = vmatprep.subr.mxu0 0.0
    %726 = vmatpush1.msra.mxu0 0.0
    %727 = vmatprep.subr.mxu0 0.0
    %728 = vmatpush1.msra.mxu0 0.0
    %729 = vmatprep.subr.mxu0 0.0
    %730 = vmatpush1.msra.mxu0 0.0
    %731 = vmatprep.subr.mxu0 0.0
    %732 = vmatpush1.msra.mxu0 0.0
    %733 = vmatprep.subr.mxu0 0.0
    %734 = vmatpush1.msra.mxu0 0.0
    %735 = vmatprep.subr.mxu0 0.0
    %736 = vmatpush1.msra.mxu0 0.0
    %737 = vmatprep.subr.mxu0 0.0
    %738 = vmatpush1.msra.mxu0 0.0
    %739 = vmatprep.subr.mxu0 0.0
    %740 = vmatpush1.msra.mxu0 0.0
    %741 = vmatprep.subr.mxu0 0.0
    %742 = vmatpush1.msra.mxu0 0.0
    %743 = vmatprep.subr.mxu0 0.0
    %744 = vmatpush1.msra.mxu0 0.0
    %745 = vmatprep.subr.mxu0 0.0
    %746 = vmatpush1.msra.mxu0 0.0
    %747 = vmatprep.subr.mxu0 0.0
    %748 = vmatpush1.msra.mxu0 0.0
    %749 = vmatprep.subr.mxu0 0.0
    %750 = vmatpush1.msra.mxu0 0.0
    %751 = vmatprep.subr.mxu0 0.0
    %752 = vmatpush1.msra.mxu0 0.0
    %753 = vmatprep.subr.mxu0 0.0
    %754 = vmatpush1.msra.mxu0 0.0
    %755 = vmatprep.subr.mxu0 0.0
    %756 = vmatpush1.msra.mxu0 0.0
    %757 = vmatprep.subr.mxu0 0.0
    %758 = vmatpush1.msra.mxu0 0.0
    %759 = vmatprep.subr.mxu0 0.0
    %760 = vmatpush1.msra.mxu0 0.0
    %761 = vmatprep.subr.mxu0 0.0
    %762 = vmatpush1.msra.mxu0 0.0
    %763 = vmatprep.subr.mxu0 0.0
    %764 = vmatpush1.msra.mxu0 0.0
    %765 = vmatprep.subr.mxu0 0.0
    %766 = vmatpush1.msra.mxu0 0.0
    %767 = vmatprep.subr.mxu0 0.0
    %768 = vmatpush1.msra.mxu0 0.0
    %769 = vmatprep.subr.mxu0 0.0
    %770 = vmatpush1.msra.mxu0 0.0
    %771 = vmatprep.subr.mxu0 0.0
    %772 = vmatpush1.msra.mxu0 0.0
    %773 = vmatprep.subr.mxu0 0.0
    %774 = vmatpush1.msra.mxu0 0.0
    %775 = vmatprep.mubr.f32.mxu0 0.0
    %776 = vmatmul.mubr.f32.gmra.mrb[0].mxu0 %v709
    %v777 = vpop.f32.mrb[0].mxu0
    %v778 = vadd.f32 %v705, %v777
    %v779 = vpop.f32.mrb[0].mxu0
    %v780 = vadd.f32 %v705, %v779
    %781 = vdwg.mxu0
    %v783 = vadd.f32 %v778, %v44
    %v784 = vadd.f32 %v780, %v61
    %v787 = vcombine.low %v783, %v784
    %789 = vst [vmem:[#allocation2] sm:$0xff] %v787
    %s790 = scalar_lea.vmem %s0, 8
    %v791 = vld [vmem:[%s790] sm:$0xff]
    %v793 = vcombine.high %v791, %v791
    %v794 = vsel %vm72, %v791, 0
    %v796 = vsel %vm72, %v793, 0
    %798 = vmatprep.subr.mxu0 %v796
    %799 = vmatpush1.msra.mxu0 %v794
    %800 = vmatprep.subr.mxu0 0.0
    %801 = vmatpush1.msra.mxu0 0.0
    %802 = vmatprep.subr.mxu0 0.0
    %803 = vmatpush1.msra.mxu0 0.0
    %804 = vmatprep.subr.mxu0 0.0
    %805 = vmatpush1.msra.mxu0 0.0
    %806 = vmatprep.subr.mxu0 0.0
    %807 = vmatpush1.msra.mxu0 0.0
    %808 = vmatprep.subr.mxu0 0.0
    %809 = vmatpush1.msra.mxu0 0.0
    %810 = vmatprep.subr.mxu0 0.0
    %811 = vmatpush1.msra.mxu0 0.0
    %812 = vmatprep.subr.mxu0 0.0
    %813 = vmatpush1.msra.mxu0 0.0
    %814 = vmatprep.subr.mxu0 0.0
    %815 = vmatpush1.msra.mxu0 0.0
    %816 = vmatprep.subr.mxu0 0.0
    %817 = vmatpush1.msra.mxu0 0.0
    %818 = vmatprep.subr.mxu0 0.0
    %819 = vmatpush1.msra.mxu0 0.0
    %820 = vmatprep.subr.mxu0 0.0
    %821 = vmatpush1.msra.mxu0 0.0
    %822 = vmatprep.subr.mxu0 0.0
    %823 = vmatpush1.msra.mxu0 0.0
    %824 = vmatprep.subr.mxu0 0.0
    %825 = vmatpush1.msra.mxu0 0.0
    %826 = vmatprep.subr.mxu0 0.0
    %827 = vmatpush1.msra.mxu0 0.0
    %828 = vmatprep.subr.mxu0 0.0
    %829 = vmatpush1.msra.mxu0 0.0
    %830 = vmatprep.subr.mxu0 0.0
    %831 = vmatpush1.msra.mxu0 0.0
    %832 = vmatprep.subr.mxu0 0.0
    %833 = vmatpush1.msra.mxu0 0.0
    %834 = vmatprep.subr.mxu0 0.0
    %835 = vmatpush1.msra.mxu0 0.0
    %836 = vmatprep.subr.mxu0 0.0
    %837 = vmatpush1.msra.mxu0 0.0
    %838 = vmatprep.subr.mxu0 0.0
    %839 = vmatpush1.msra.mxu0 0.0
    %840 = vmatprep.subr.mxu0 0.0
    %841 = vmatpush1.msra.mxu0 0.0
    %842 = vmatprep.subr.mxu0 0.0
    %843 = vmatpush1.msra.mxu0 0.0
    %844 = vmatprep.subr.mxu0 0.0
    %845 = vmatpush1.msra.mxu0 0.0
    %846 = vmatprep.subr.mxu0 0.0
    %847 = vmatpush1.msra.mxu0 0.0
    %848 = vmatprep.subr.mxu0 0.0
    %849 = vmatpush1.msra.mxu0 0.0
    %850 = vmatprep.subr.mxu0 0.0
    %851 = vmatpush1.msra.mxu0 0.0
    %852 = vmatprep.subr.mxu0 0.0
    %853 = vmatpush1.msra.mxu0 0.0
    %854 = vmatprep.subr.mxu0 0.0
    %855 = vmatpush1.msra.mxu0 0.0
    %856 = vmatprep.subr.mxu0 0.0
    %857 = vmatpush1.msra.mxu0 0.0
    %858 = vmatprep.subr.mxu0 0.0
    %859 = vmatpush1.msra.mxu0 0.0
    %860 = vmatprep.subr.mxu0 0.0
    %861 = vmatpush1.msra.mxu0 0.0
    %862 = vmatprep.mubr.f32.mxu0 0.0
    %863 = vmatmul.mubr.f32.gmra.mrb[0].mxu0 %v64
    %v864 = vpop.f32.mrb[0].mxu0
    %v865 = vadd.f32 %v48, %v864
    %v866 = vpop.f32.mrb[0].mxu0
    %v867 = vadd.f32 %v48, %v866
    %868 = vmatprep.mubr.f32.mxu0 0.0
    %869 = vmatmul.mubr.f32.gmra.mrb[0].mxu0 %v67
    %v870 = vpop.f32.mrb[0].mxu0
    %v871 = vadd.f32 %v53, %v870
    %v872 = vpop.f32.mrb[0].mxu0
    %v873 = vadd.f32 %v53, %v872
    %874 = vmatprep.mubr.f32.mxu0 0.0
    %875 = vmatmul.mubr.f32.gmra.mrb[0].mxu0 %v70
    %v876 = vpop.f32.mrb[0].mxu0
    %v877 = vadd.f32 %v58, %v876
    %v878 = vpop.f32.mrb[0].mxu0
    %v879 = vadd.f32 %v58, %v878
    %880 = vdwg.mxu0
    %v881 = vmax.f32 %v865, 0.0
    %v882 = vmax.f32 %v867, 0.0
    %v883 = vmax.f32 %v871, 0.0
    %v884 = vmax.f32 %v873, 0.0
    %v885 = vmax.f32 %v877, 0.0
    %v886 = vmax.f32 %v879, 0.0
    %v887 = vmin.f32 %v881, 6.0
    %v888 = vmin.f32 %v882, 6.0
    %v889 = vmin.f32 %v883, 6.0
    %v890 = vmin.f32 %v884, 6.0
    %v891 = vmin.f32 %v885, 6.0
    %v892 = vmin.f32 %v886, 6.0
    %v893 = vmul.f32 %v887, %v174
    %v894 = vmul.f32 %v888, %v174
    %v895 = vmul.f32 %v889, %v178
    %v896 = vmul.f32 %v890, %v178
    %v897 = vmul.f32 %v891, %v182
    %v898 = vmul.f32 %v892, %v182
    %899 = vrot.lane.b32.xlu0 %v887, 17
    %v900 = vpop.permute.xlu0 %899
    %901 = vrot.lane.b32.xlu0 %v889, 17
    %v902 = vpop.permute.xlu0 %901
    %903 = vrot.lane.b32.xlu0 %v891, 17
    %v904 = vpop.permute.xlu0 %903
    %905 = vrot.lane.b32.xlu0 %v888, 17
    %v906 = vpop.permute.xlu0 %905
    %907 = vrot.lane.b32.xlu0 %v890, 17
    %v908 = vpop.permute.xlu0 %907
    %909 = vrot.lane.b32.xlu0 %v892, 17
    %v910 = vpop.permute.xlu0 %909
    %v911 = vsel %vm204, %v900, %v906
    %v912 = vsel %vm204, %v902, %v908
    %v913 = vsel %vm204, %v904, %v910
    %v914 = vsel %vm204, %v906, %v900
    %v915 = vsel %vm204, %v908, %v902
    %v916 = vsel %vm204, %v910, %v904
    %v917 = vmul.f32 %v914, %v215
    %v918 = vmul.f32 %v911, %v219
    %v919 = vmul.f32 %v915, %v215
    %v920 = vmul.f32 %v912, %v219
    %v921 = vmul.f32 %v916, %v215
    %v922 = vmul.f32 %v913, %v219
    %v923 = vmul.f32 %v917, %v230
    %v924 = vmul.f32 %v918, %v230
    %v925 = vmul.f32 %v919, %v234
    %v926 = vmul.f32 %v920, %v234
    %v927 = vmul.f32 %v921, %v238
    %v928 = vmul.f32 %v922, %v238
    %v929 = vadd.f32 %v893, %v923
    %v930 = vadd.f32 %v894, %v924
    %v931 = vadd.f32 %v895, %v925
    %v932 = vadd.f32 %v896, %v926
    %v933 = vadd.f32 %v897, %v927
    %v934 = vadd.f32 %v898, %v928
    %935 = vrot.lane.b32.xlu0 %v887, 16
    %v936 = vpop.permute.xlu0 %935
    %937 = vrot.lane.b32.xlu0 %v889, 16
    %v938 = vpop.permute.xlu0 %937
    %939 = vrot.lane.b32.xlu0 %v891, 16
    %v940 = vpop.permute.xlu0 %939
    %941 = vrot.lane.b32.xlu0 %v888, 16
    %v942 = vpop.permute.xlu0 %941
    %943 = vrot.lane.b32.xlu0 %v890, 16
    %v944 = vpop.permute.xlu0 %943
    %945 = vrot.lane.b32.xlu0 %v892, 16
    %v946 = vpop.permute.xlu0 %945
    %v947 = vsel %vm264, %v936, %v942
    %v948 = vsel %vm264, %v938, %v944
    %v949 = vsel %vm264, %v940, %v946
    %v950 = vsel %vm264, %v942, %v936
    %v951 = vsel %vm264, %v944, %v938
    %v952 = vsel %vm264, %v946, %v940
    %v953 = vmul.f32 %v950, %v275
    %v954 = vmul.f32 %v947, %v279
    %v955 = vmul.f32 %v951, %v275
    %v956 = vmul.f32 %v948, %v279
    %v957 = vmul.f32 %v952, %v275
    %v958 = vmul.f32 %v949, %v279
    %v959 = vmul.f32 %v953, %v290
    %v960 = vmul.f32 %v954, %v290
    %v961 = vmul.f32 %v955, %v294
    %v962 = vmul.f32 %v956, %v294
    %v963 = vmul.f32 %v957, %v298
    %v964 = vmul.f32 %v958, %v298
    %v965 = vadd.f32 %v929, %v959
    %v966 = vadd.f32 %v930, %v960
    %v967 = vadd.f32 %v931, %v961
    %v968 = vadd.f32 %v932, %v962
    %v969 = vadd.f32 %v933, %v963
    %v970 = vadd.f32 %v934, %v964
    %971 = vrot.lane.b32.xlu0 %v887, 15
    %v972 = vpop.permute.xlu0 %971
    %973 = vrot.lane.b32.xlu0 %v889, 15
    %v974 = vpop.permute.xlu0 %973
    %975 = vrot.lane.b32.xlu0 %v891, 15
    %v976 = vpop.permute.xlu0 %975
    %977 = vrot.lane.b32.xlu0 %v888, 15
    %v978 = vpop.permute.xlu0 %977
    %979 = vrot.lane.b32.xlu0 %v890, 15
    %v980 = vpop.permute.xlu0 %979
    %981 = vrot.lane.b32.xlu0 %v892, 15
    %v982 = vpop.permute.xlu0 %981
    %v983 = vsel %vm324, %v972, %v978
    %v984 = vsel %vm324, %v974, %v980
    %v985 = vsel %vm324, %v976, %v982
    %v986 = vsel %vm324, %v978, %v972
    %v987 = vsel %vm324, %v980, %v974
    %v988 = vsel %vm324, %v982, %v976
    %v989 = vmul.f32 %v986, %v335
    %v990 = vmul.f32 %v983, %v339
    %v991 = vmul.f32 %v987, %v335
    %v992 = vmul.f32 %v984, %v339
    %v993 = vmul.f32 %v988, %v335
    %v994 = vmul.f32 %v985, %v339
    %v995 = vmul.f32 %v989, %v350
    %v996 = vmul.f32 %v990, %v350
    %v997 = vmul.f32 %v991, %v354
    %v998 = vmul.f32 %v992, %v354
    %v999 = vmul.f32 %v993, %v358
    %v1000 = vmul.f32 %v994, %v358
    %v1001 = vadd.f32 %v965, %v995
    %v1002 = vadd.f32 %v966, %v996
    %v1003 = vadd.f32 %v967, %v997
    %v1004 = vadd.f32 %v968, %v998
    %v1005 = vadd.f32 %v969, %v999
    %v1006 = vadd.f32 %v970, %v1000
    %1007 = vrot.lane.b32.xlu0 %v887, 1
    %v1008 = vpop.permute.xlu0 %1007
    %1009 = vrot.lane.b32.xlu0 %v889, 1
    %v1010 = vpop.permute.xlu0 %1009
    %1011 = vrot.lane.b32.xlu0 %v891, 1
    %v1012 = vpop.permute.xlu0 %1011
    %1013 = vrot.lane.b32.xlu0 %v888, 1
    %v1014 = vpop.permute.xlu0 %1013
    %1015 = vrot.lane.b32.xlu0 %v890, 1
    %v1016 = vpop.permute.xlu0 %1015
    %1017 = vrot.lane.b32.xlu0 %v892, 1
    %v1018 = vpop.permute.xlu0 %1017
    %v1019 = vsel %vm384, %v1008, %v1014
    %v1020 = vsel %vm384, %v1010, %v1016
    %v1021 = vsel %vm384, %v1012, %v1018
    %v1022 = vsel %vm384, %v1014, %v1008
    %v1023 = vsel %vm384, %v1016, %v1010
    %v1024 = vsel %vm384, %v1018, %v1012
    %v1025 = vmul.f32 %v1022, %v395
    %v1026 = vmul.f32 %v1019, %v399
    %v1027 = vmul.f32 %v1023, %v395
    %v1028 = vmul.f32 %v1020, %v399
    %v1029 = vmul.f32 %v1024, %v395
    %v1030 = vmul.f32 %v1021, %v399
    %v1031 = vmul.f32 %v1025, %v410
    %v1032 = vmul.f32 %v1026, %v410
    %v1033 = vmul.f32 %v1027, %v414
    %v1034 = vmul.f32 %v1028, %v414
    %v1035 = vmul.f32 %v1029, %v418
    %v1036 = vmul.f32 %v1030, %v418
    %v1037 = vadd.f32 %v1001, %v1031
    %v1038 = vadd.f32 %v1002, %v1032
    %v1039 = vadd.f32 %v1003, %v1033
    %v1040 = vadd.f32 %v1004, %v1034
    %v1041 = vadd.f32 %v1005, %v1035
    %v1042 = vadd.f32 %v1006, %v1036
    %1043 = vrot.lane.b32.xlu0 %v887, 127
    %v1044 = vpop.permute.xlu0 %1043
    %1045 = vrot.lane.b32.xlu0 %v889, 127
    %v1046 = vpop.permute.xlu0 %1045
    %1047 = vrot.lane.b32.xlu0 %v891, 127
    %v1048 = vpop.permute.xlu0 %1047
    %1049 = vrot.lane.b32.xlu0 %v888, 127
    %v1050 = vpop.permute.xlu0 %1049
    %1051 = vrot.lane.b32.xlu0 %v890, 127
    %v1052 = vpop.permute.xlu0 %1051
    %1053 = vrot.lane.b32.xlu0 %v892, 127
    %v1054 = vpop.permute.xlu0 %1053
    %v1055 = vsel %vm444, %v1044, %v1050
    %v1056 = vsel %vm444, %v1046, %v1052
    %v1057 = vsel %vm444, %v1048, %v1054
    %v1058 = vsel %vm444, %v1050, %v1044
    %v1059 = vsel %vm444, %v1052, %v1046
    %v1060 = vsel %vm444, %v1054, %v1048
    %v1061 = vmul.f32 %v1055, %v455
    %v1062 = vmul.f32 %v1058, %v459
    %v1063 = vmul.f32 %v1056, %v455
    %v1064 = vmul.f32 %v1059, %v459
    %v1065 = vmul.f32 %v1057, %v455
    %v1066 = vmul.f32 %v1060, %v459
    %v1067 = vmul.f32 %v1061, %v470
    %v1068 = vmul.f32 %v1062, %v470
    %v1069 = vmul.f32 %v1063, %v474
    %v1070 = vmul.f32 %v1064, %v474
    %v1071 = vmul.f32 %v1065, %v478
    %v1072 = vmul.f32 %v1066, %v478
    %v1073 = vadd.f32 %v1037, %v1067
    %v1074 = vadd.f32 %v1038, %v1068
    %v1075 = vadd.f32 %v1039, %v1069
    %v1076 = vadd.f32 %v1040, %v1070
    %v1077 = vadd.f32 %v1041, %v1071
    %v1078 = vadd.f32 %v1042, %v1072
    %1079 = vrot.lane.b32.xlu0 %v887, 113
    %v1080 = vpop.permute.xlu0 %1079
    %1081 = vrot.lane.b32.xlu0 %v889, 113
    %v1082 = vpop.permute.xlu0 %1081
    %1083 = vrot.lane.b32.xlu0 %v891, 113
    %v1084 = vpop.permute.xlu0 %1083
    %1085 = vrot.lane.b32.xlu0 %v888, 113
    %v1086 = vpop.permute.xlu0 %1085
    %1087 = vrot.lane.b32.xlu0 %v890, 113
    %v1088 = vpop.permute.xlu0 %1087
    %1089 = vrot.lane.b32.xlu0 %v892, 113
    %v1090 = vpop.permute.xlu0 %1089
    %v1091 = vsel %vm504, %v1080, %v1086
    %v1092 = vsel %vm504, %v1082, %v1088
    %v1093 = vsel %vm504, %v1084, %v1090
    %v1094 = vsel %vm504, %v1086, %v1080
    %v1095 = vsel %vm504, %v1088, %v1082
    %v1096 = vsel %vm504, %v1090, %v1084
    %v1097 = vmul.f32 %v1091, %v515
    %v1098 = vmul.f32 %v1094, %v519
    %v1099 = vmul.f32 %v1092, %v515
    %v1100 = vmul.f32 %v1095, %v519
    %v1101 = vmul.f32 %v1093, %v515
    %v1102 = vmul.f32 %v1096, %v519
    %v1103 = vmul.f32 %v1097, %v530
    %v1104 = vmul.f32 %v1098, %v530
    %v1105 = vmul.f32 %v1099, %v534
    %v1106 = vmul.f32 %v1100, %v534
    %v1107 = vmul.f32 %v1101, %v538
    %v1108 = vmul.f32 %v1102, %v538
    %v1109 = vadd.f32 %v1073, %v1103
    %v1110 = vadd.f32 %v1074, %v1104
    %v1111 = vadd.f32 %v1075, %v1105
    %v1112 = vadd.f32 %v1076, %v1106
    %v1113 = vadd.f32 %v1077, %v1107
    %v1114 = vadd.f32 %v1078, %v1108
    %1115 = vrot.lane.b32.xlu0 %v887, 112
    %v1116 = vpop.permute.xlu0 %1115
    %1117 = vrot.lane.b32.xlu0 %v889, 112
    %v1118 = vpop.permute.xlu0 %1117
    %1119 = vrot.lane.b32.xlu0 %v891, 112
    %v1120 = vpop.permute.xlu0 %1119
    %1121 = vrot.lane.b32.xlu0 %v888, 112
    %v1122 = vpop.permute.xlu0 %1121
    %1123 = vrot.lane.b32.xlu0 %v890, 112
    %v1124 = vpop.permute.xlu0 %1123
    %1125 = vrot.lane.b32.xlu0 %v892, 112
    %v1126 = vpop.permute.xlu0 %1125
    %v1127 = vsel %vm564, %v1116, %v1122
    %v1128 = vsel %vm564, %v1118, %v1124
    %v1129 = vsel %vm564, %v1120, %v1126
    %v1130 = vsel %vm564, %v1122, %v1116
    %v1131 = vsel %vm564, %v1124, %v1118
    %v1132 = vsel %vm564, %v1126, %v1120
    %v1133 = vmul.f32 %v1127, %v575
    %v1134 = vmul.f32 %v1130, %v579
    %v1135 = vmul.f32 %v1128, %v575
    %v1136 = vmul.f32 %v1131, %v579
    %v1137 = vmul.f32 %v1129, %v575
    %v1138 = vmul.f32 %v1132, %v579
    %v1139 = vmul.f32 %v1133, %v590
    %v1140 = vmul.f32 %v1134, %v590
    %v1141 = vmul.f32 %v1135, %v594
    %v1142 = vmul.f32 %v1136, %v594
    %v1143 = vmul.f32 %v1137, %v598
    %v1144 = vmul.f32 %v1138, %v598
    %v1145 = vadd.f32 %v1109, %v1139
    %v1146 = vadd.f32 %v1110, %v1140
    %v1147 = vadd.f32 %v1111, %v1141
    %v1148 = vadd.f32 %v1112, %v1142
    %v1149 = vadd.f32 %v1113, %v1143
    %v1150 = vadd.f32 %v1114, %v1144
    %1151 = vrot.lane.b32.xlu0 %v887, 111
    %v1152 = vpop.permute.xlu0 %1151
    %1153 = vrot.lane.b32.xlu0 %v889, 111
    %v1154 = vpop.permute.xlu0 %1153
    %1155 = vrot.lane.b32.xlu0 %v891, 111
    %v1156 = vpop.permute.xlu0 %1155
    %1157 = vrot.lane.b32.xlu0 %v888, 111
    %v1158 = vpop.permute.xlu0 %1157
    %1159 = vrot.lane.b32.xlu0 %v890, 111
    %v1160 = vpop.permute.xlu0 %1159
    %1161 = vrot.lane.b32.xlu0 %v892, 111
    %v1162 = vpop.permute.xlu0 %1161
    %v1163 = vsel %vm624, %v1152, %v1158
    %v1164 = vsel %vm624, %v1154, %v1160
    %v1165 = vsel %vm624, %v1156, %v1162
    %v1166 = vsel %vm624, %v1158, %v1152
    %v1167 = vsel %vm624, %v1160, %v1154
    %v1168 = vsel %vm624, %v1162, %v1156
    %v1169 = vmul.f32 %v1163, %v635
    %v1170 = vmul.f32 %v1166, %v639
    %v1171 = vmul.f32 %v1164, %v635
    %v1172 = vmul.f32 %v1167, %v639
    %v1173 = vmul.f32 %v1165, %v635
    %v1174 = vmul.f32 %v1168, %v639
    %v1175 = vmul.f32 %v1169, %v650
    %v1176 = vmul.f32 %v1170, %v650
    %v1177 = vmul.f32 %v1171, %v654
    %v1178 = vmul.f32 %v1172, %v654
    %v1179 = vmul.f32 %v1173, %v658
    %v1180 = vmul.f32 %v1174, %v658
    %v1181 = vadd.f32 %v1145, %v1175
    %v1182 = vadd.f32 %v1146, %v1176
    %v1183 = vadd.f32 %v1147, %v1177
    %v1184 = vadd.f32 %v1148, %v1178
    %v1185 = vadd.f32 %v1149, %v1179
    %v1186 = vadd.f32 %v1150, %v1180
    %v1187 = vadd.f32 %v1181, %v674
    %v1188 = vadd.f32 %v1182, %v674
    %v1189 = vadd.f32 %v1183, %v678
    %v1190 = vadd.f32 %v1184, %v678
    %v1191 = vadd.f32 %v1185, %v682
    %v1192 = vadd.f32 %v1186, %v682
    %v1193 = vmax.f32 %v1187, 0.0
    %v1194 = vmax.f32 %v1188, 0.0
    %v1195 = vmax.f32 %v1189, 0.0
    %v1196 = vmax.f32 %v1190, 0.0
    %v1197 = vmax.f32 %v1191, 0.0
    %v1198 = vmax.f32 %v1192, 0.0
    %v1199 = vmin.f32 %v1193, 6.0
    %v1200 = vmin.f32 %v1194, 6.0
    %v1201 = vmin.f32 %v1195, 6.0
    %v1202 = vmin.f32 %v1196, 6.0
    %v1203 = vmin.f32 %v1197, 6.0
    %v1204 = vmin.f32 %v1198, 6.0
    %1205 = vmatprep.subr.mxu0 %v1200
    %1206 = vmatpush1.msra.mxu0 %v1199
    %1207 = vmatprep.subr.mxu0 %v1202
    %1208 = vmatpush1.msra.mxu0 %v1201
    %1209 = vmatprep.subr.mxu0 %v1204
    %1210 = vmatpush1.msra.mxu0 %v1203
    %1211 = vmatprep.subr.mxu0 0.0
    %1212 = vmatpush1.msra.mxu0 0.0
    %1213 = vmatprep.subr.mxu0 0.0
    %1214 = vmatpush1.msra.mxu0 0.0
    %1215 = vmatprep.subr.mxu0 0.0
    %1216 = vmatpush1.msra.mxu0 0.0
    %1217 = vmatprep.subr.mxu0 0.0
    %1218 = vmatpush1.msra.mxu0 0.0
    %1219 = vmatprep.subr.mxu0 0.0
    %1220 = vmatpush1.msra.mxu0 0.0
    %1221 = vmatprep.subr.mxu0 0.0
    %1222 = vmatpush1.msra.mxu0 0.0
    %1223 = vmatprep.subr.mxu0 0.0
    %1224 = vmatpush1.msra.mxu0 0.0
    %1225 = vmatprep.subr.mxu0 0.0
    %1226 = vmatpush1.msra.mxu0 0.0
    %1227 = vmatprep.subr.mxu0 0.0
    %1228 = vmatpush1.msra.mxu0 0.0
    %1229 = vmatprep.subr.mxu0 0.0
    %1230 = vmatpush1.msra.mxu0 0.0
    %1231 = vmatprep.subr.mxu0 0.0
    %1232 = vmatpush1.msra.mxu0 0.0
    %1233 = vmatprep.subr.mxu0 0.0
    %1234 = vmatpush1.msra.mxu0 0.0
    %1235 = vmatprep.subr.mxu0 0.0
    %1236 = vmatpush1.msra.mxu0 0.0
    %1237 = vmatprep.subr.mxu0 0.0
    %1238 = vmatpush1.msra.mxu0 0.0
    %1239 = vmatprep.subr.mxu0 0.0
    %1240 = vmatpush1.msra.mxu0 0.0
    %1241 = vmatprep.subr.mxu0 0.0
    %1242 = vmatpush1.msra.mxu0 0.0
    %1243 = vmatprep.subr.mxu0 0.0
    %1244 = vmatpush1.msra.mxu0 0.0
    %1245 = vmatprep.subr.mxu0 0.0
    %1246 = vmatpush1.msra.mxu0 0.0
    %1247 = vmatprep.subr.mxu0 0.0
    %1248 = vmatpush1.msra.mxu0 0.0
    %1249 = vmatprep.subr.mxu0 0.0
    %1250 = vmatpush1.msra.mxu0 0.0
    %1251 = vmatprep.subr.mxu0 0.0
    %1252 = vmatpush1.msra.mxu0 0.0
    %1253 = vmatprep.subr.mxu0 0.0
    %1254 = vmatpush1.msra.mxu0 0.0
    %1255 = vmatprep.subr.mxu0 0.0
    %1256 = vmatpush1.msra.mxu0 0.0
    %1257 = vmatprep.subr.mxu0 0.0
    %1258 = vmatpush1.msra.mxu0 0.0
    %1259 = vmatprep.subr.mxu0 0.0
    %1260 = vmatpush1.msra.mxu0 0.0
    %1261 = vmatprep.subr.mxu0 0.0
    %1262 = vmatpush1.msra.mxu0 0.0
    %1263 = vmatprep.subr.mxu0 0.0
    %1264 = vmatpush1.msra.mxu0 0.0
    %1265 = vmatprep.subr.mxu0 0.0
    %1266 = vmatpush1.msra.mxu0 0.0
    %1267 = vmatprep.subr.mxu0 0.0
    %1268 = vmatpush1.msra.mxu0 0.0
    %1269 = vmatprep.mubr.f32.mxu0 0.0
    %1270 = vmatmul.mubr.f32.gmra.mrb[0].mxu0 %v709
    %v1271 = vpop.f32.mrb[0].mxu0
    %v1272 = vadd.f32 %v705, %v1271
    %v1273 = vpop.f32.mrb[0].mxu0
    %v1274 = vadd.f32 %v705, %v1273
    %1275 = vdwg.mxu0
    %v1277 = vadd.f32 %v1272, %v791
    %v1278 = vadd.f32 %v1274, %v793
    %v1281 = vcombine.low %v1277, %v1278
    %s1283 = scalar_lea.vmem [#allocation2], 8
    %1284 = vst [vmem:[%s1283] sm:$0xff] %v1281
    // Predicated region
    $region22: #{tpu_custom_call.1} parent=1 // pred_check
      _
    $region23: #{tpu_custom_call.1} parent=1 // pred_check_branch
      %1286 = sbr.rel (0) target = $region25
    $region24: #{tpu_custom_call.1} parent=1 // pred_region
      %s1288 = ssub.s32 256, 256
      %1289 = vsyncadd [#allocation3], %s1288
      %s1290 = sshll.u32 [#allocation2], 4
      %s1291 = int_to_ptr.vmem [resolvable:$true] %s1290
      %1296 = dma.vmem_to_hbm [thread:$0]  %s1291, 256, %s5, [#allocation3], 128, 128, 8
    $region25: #{tpu_custom_call.1} parent=1 // pred_fallthru
      _
    // Predicated region
    $region26: #{tpu_custom_call.1} parent=1 // pred_check
      _
    $region27: #{tpu_custom_call.1} parent=1 // pred_check_branch
      %1298 = sbr.rel (0) target = $region29
    $region28: #{tpu_custom_call.1} parent=1 // pred_region
      %1299 = dma.done [#allocation3], 256
    $region29: #{tpu_custom_call.1} parent=1 // pred_fallthru
      _
    %1300 = vsyncpa [#allocation3], 1

</llo_original>
